<compile_context>
chip_gen: v7x
topology: tpu7x:2x2x1
jax: 0.10.0
libtpu: 0.0.40
codegen_flags: <defaults>
</compile_context>

<pallas_src>
import math
from functools import partial

import jax
import jax.numpy as jnp
from jax import lax
from jax.experimental import pallas as pl
from jax.experimental.pallas import tpu as pltpu

LN_EPS = 1e-6

_ATTN_NAMES = ("q_global", "k_global", "v_global",
               "q_linear", "k_linear", "v_linear", "out_linear")


def _attn_block_kernel(
    x_ref,
    wg_ref, bg_ref,          # fused q/k/v *_global weights  (D, 3D), (1, 3D)
    wf_ref, bf_ref,          # fused q/k/v *_linear weights  (D, 3D), (1, 3D)
    wo_ref, bo_ref,          # out_linear                    (D, D),  (1, D)
    w1_ref, b1_ref,          # FFN w_1                       (D, F),  (1, F)
    w2_ref, b2_ref,          # FFN w_2                       (F, D),  (1, D)
    ln1a_ref, ln1b_ref, ln2a_ref, ln2b_ref,
    o_ref,
    o_scr,                   # (R, D) f32 VMEM: per-head outputs staged here
    *, n_head: int, d_k: int, seq: int, tb: int, mxu_dtype, approx_softmax: bool,
):
    D = n_head * d_k
    R = tb * seq                           # rows handled by this grid step

    def mm(a, b):
        # Single place controlling the MXU input dtype (f32 or bf16);
        # accumulation is always f32.
        return jnp.dot(a.astype(mxu_dtype), b.astype(mxu_dtype),
                       preferred_element_type=jnp.float32)

    def layer_norm(v, a_ref, b_ref):
        # Matches the PyTorch module: unbiased std, eps added to std (not var).
        mean = jnp.mean(v, axis=-1, keepdims=True)
        c = v - mean
        var = jnp.sum(c * c, axis=-1, keepdims=True) * (1.0 / (D - 1))
        inv = 1.0 / (jnp.sqrt(var) + LN_EPS)      # one reciprocal per row
        return a_ref[...] * (c * inv) + b_ref[...]

    x = x_ref[...].astype(jnp.float32)     # (R, D): tb batch elements x seq rows

    # ---------------- sublayer 0: x + attn(norm1(x)) ----------------
    xn = layer_norm(x, ln1a_ref, ln1b_ref)                  # (R, D), f32

    # Fused "feat" Q/K/V over ALL rows: one (R, D) @ (D, 3D) matmul.
    qkv_f = mm(xn, wf_ref[...]) + bf_ref[...]               # (R, 3D)

    # Fused *_global Q/K/V only for the tb CLS rows (row 0 of each sequence).
    xn3 = xn.reshape(tb, seq, D)
    x_cls = xn3[:, 0, :]                                    # (tb, D)
    qkv_c = mm(x_cls, wg_ref[...]) + bg_ref[...]            # (tb, 3D)

    is_cls = lax.broadcasted_iota(jnp.int32, (1, seq, 1), 1) == 0

    def patch(lo):
        feat = qkv_f[:, lo:lo + D].reshape(tb, seq, D)
        cls = qkv_c[:, lo:lo + D]
        return jnp.where(is_cls, cls[:, None, :], feat)     # (tb, S, D)

    scale = 1.0 / math.sqrt(d_k)
    q3 = patch(0) * scale            # fold 1/sqrt(d_k) into Q once (f32)
    k3 = patch(D)
    v3 = patch(2 * D)

    # Hoisted casts: one MXU-dtype cast per tensor, not one per head.
    q3m = q3.astype(mxu_dtype)
    k3m = k3.astype(mxu_dtype)
    v3m = v3.astype(mxu_dtype)

    # Per-head scaled-dot-product attention, batched over tb.  Head outputs are
    # staged into columns of o_scr so the concat + out_linear is a single
    # full-K matmul below.  (At realistic d_k < 128 a head-batched dot_general
    # over a (tb*H, S, d_k) layout avoids the per-head lane slices; the loop is
    # kept here because it lowers robustly at any d_k.)
    for h in range(n_head):
        lo = h * d_k
        qh = q3m[:, :, lo:lo + d_k]                          # (tb, S, d_k)
        kh = k3m[:, :, lo:lo + d_k]
        vh = v3m[:, :, lo:lo + d_k]

        s = jnp.einsum("bqd,bkd->bqk", qh, kh,
                       preferred_element_type=jnp.float32)   # (tb, S, S), f32
        m = jnp.max(s, axis=-1, keepdims=True)
        p = jnp.exp(s - m)                                   # f32 softmax math
        denom = jnp.sum(p, axis=-1, keepdims=True)
        if approx_softmax:
            p = p * pl.reciprocal(denom, approx=True)        # EUP slot, eval-only
        else:
            p = p / denom
        # attn-weight dropout is identity in eval mode.
        oh = jnp.einsum("bqk,bkd->bqd", p.astype(mxu_dtype), vh,
                        preferred_element_type=jnp.float32)  # (tb, S, d_k)
        o_scr[:, lo:lo + d_k] = oh.reshape(R, d_k)

    # Single full-K output projection (concat of heads == column layout of o_scr).
    x1 = x + mm(o_scr[...], wo_ref[...]) + bo_ref[...]       # residual 1 (dropout = id)

    # ---------------- sublayer 1: x1 + ffn(norm2(x1)) ----------------
    yn = layer_norm(x1, ln2a_ref, ln2b_ref)
    h1 = jnp.maximum(mm(yn, w1_ref[...]) + b1_ref[...], 0.0)
    out = x1 + mm(h1, w2_ref[...]) + b2_ref[...]             # residual 2 (dropout = id)

    o_ref[...] = out.astype(o_ref.dtype)


def attn_block(x, params, *, n_head, tb=None, use_bf16_mxu=True,
               single_buffer_weights=None, approx_softmax=True):
    """Fused AttnBlock forward.  x: [B, S, D] float32; params: see init_params."""
    B, S, D = x.shape
    assert D % n_head == 0
    d_k = D // n_head
    dim_ff = params["w1_w"].shape[1]

    # bf16 MXU inputs + f32 accumulation is the right default on v5e/v6e/v7x
    # (v5e's MXU is bf16-native; f32 matmul there is multi-pass emulation).
    w_dtype = jnp.bfloat16 if use_bf16_mxu else x.dtype
    mxu_dtype = jnp.bfloat16 if use_bf16_mxu else jnp.float32

    # ---- fuse Q/K/V weights wrapper-side (one-time, outside the kernel) ----
    def cat_w(names):
        return jnp.concatenate([params[n + "_w"] for n in names], axis=1).astype(w_dtype)

    def cat_b(names):
        return jnp.concatenate([params[n + "_b"] for n in names], axis=1)

    wg = cat_w(("q_global", "k_global", "v_global"))   # (D, 3D)
    bg = cat_b(("q_global", "k_global", "v_global"))   # (1, 3D)
    wf = cat_w(("q_linear", "k_linear", "v_linear"))
    bf = cat_b(("q_linear", "k_linear", "v_linear"))
    wo = params["out_linear_w"].astype(w_dtype)
    bo = params["out_linear_b"]
    w1 = params["w1_w"].astype(w_dtype)
    b1 = params["w1_b"]
    w2 = params["w2_w"].astype(w_dtype)
    b2 = params["w2_b"]
    weights = [wg, bg, wf, bf, wo, bo, w1, b1, w2, b2,
               params["ln1_a"], params["ln1_b"], params["ln2_a"], params["ln2_b"]]
    weight_bytes = sum(int(a.size) * a.dtype.itemsize for a in weights)

    # Constant-index weight blocks are double-buffered by default; above ~8 MiB
    # (realistic D / dim_ff) single-buffer them so they fit v7x's 64 MiB VMEM.
    if single_buffer_weights is None:
        single_buffer_weights = weight_bytes > (8 << 20)
    weight_buffers = 1 if single_buffer_weights else 2

    # Per-generation VMEM budget (v5e/v6e: 128 MiB, v7x: 64 MiB).
    try:
        vmem_cap = int(pltpu.get_tpu_info().vmem_capacity_bytes)
    except Exception:
        vmem_cap = 64 << 20          # conservative fallback (v7x-sized)
    budget = int(vmem_cap * 0.75)

    def vmem_est(t):
        r = t * S
        acts = r * D * 4 * 9            # x, xn, q/k/v (+mxu copies), scratch, x1, out
        acts += r * 3 * D * 4 * 2       # fused qkv (+ headroom)
        acts += r * dim_ff * 4 * 2      # FFN hidden (+ headroom)
        scores = t * S * S * 4 * 3      # per-head scores / probs (+ headroom)
        io = 2 * 2 * r * D * x.dtype.itemsize   # double-buffered in/out blocks
        return acts + scores + io + weight_buffers * weight_bytes

    if tb is None:
        # Target R = tb*S >= 256 rows to fill the MXU M dimension ...
        tb = max(1, min(B, -(-256 // S)))
        # ... but keep at least 2 grid steps when B allows it, so v7x's second
        # TensorCore gets work (harmless on 1-TC v5e/v6e).
        if B >= 2:
            tb = min(tb, max(1, B // 2))
        # ... and stay inside the per-generation VMEM budget.
        while tb > 1 and vmem_est(tb) > budget:
            tb -= 1
    tb = max(1, min(tb, B))

    grid_b = pl.cdiv(B, tb)
    B_pad = grid_b * tb
    x_flat = x.reshape(B * S, D)
    if B_pad != B:
        # Prime / non-divisible B: zero-pad the batch (padded rows produce
        # finite garbage that is sliced off below).
        x_flat = jnp.concatenate(
            [x_flat, jnp.zeros(((B_pad - B) * S, D), x.dtype)], axis=0)

    def wspec(shape):
        if single_buffer_weights:
            return pl.BlockSpec(shape, lambda i: (0, 0), pipeline_mode=pl.Buffered(1))
        return pl.BlockSpec(shape, lambda i: (0, 0))

    in_specs = [pl.BlockSpec((tb * S, D), lambda i: (i, 0))]
    in_specs += [wspec(a.shape) for a in weights]

    kernel = partial(_attn_block_kernel, n_head=n_head, d_k=d_k, seq=S, tb=tb,
                     mxu_dtype=mxu_dtype, approx_softmax=approx_softmax)

    vmem_limit = int(min(max(budget, 32 << 20), 128 << 20))

    out = pl.pallas_call(
        kernel,
        out_shape=jax.ShapeDtypeStruct((B_pad * S, D), x.dtype),
        grid_spec=pltpu.PrefetchScalarGridSpec(
            num_scalar_prefetch=0,
            grid=(grid_b,),
            in_specs=in_specs,
            out_specs=pl.BlockSpec((tb * S, D), lambda i: (i, 0)),
            scratch_shapes=[pltpu.VMEM((tb * S, D), jnp.float32)],
        ),
        compiler_params=pltpu.CompilerParams(
            # Batch grid axis is embarrassingly parallel (shards across the two
            # TensorCores on v7x; harmless elsewhere).
            dimension_semantics=("parallel",),
            vmem_limit_bytes=vmem_limit),
    )(x_flat, *weights)
    return out.reshape(B_pad, S, D)[:B]


def init_params(key, dim, dim_ff):
    """Deterministic params.  Linear weights stored as [in, out] (= W.T), bias [1, out]."""
    params = {}
    keys = iter(jax.random.split(key, 32))

    def linear(name, fan_in, fan_out):
        bound = 1.0 / math.sqrt(fan_in)
        params[name + "_w"] = jax.random.uniform(next(keys), (fan_in, fan_out),
                                                 jnp.float32, -bound, bound)
        params[name + "_b"] = jax.random.uniform(next(keys), (1, fan_out),
                                                 jnp.float32, -bound, bound)

    for name in _ATTN_NAMES:
        linear(name, dim, dim)
    linear("w1", dim, dim_ff)
    linear("w2", dim_ff, dim)
    # LayerNorm affine params (PyTorch inits ones/zeros; perturb slightly so the
    # affine path is actually exercised by the correctness check).
    for name in ("ln1", "ln2"):
        params[name + "_a"] = 1.0 + 0.1 * jax.random.normal(next(keys), (1, dim), jnp.float32)
        params[name + "_b"] = 0.1 * jax.random.normal(next(keys), (1, dim), jnp.float32)
    return params


def attn_block_ref(x, params, *, n_head):
    """Pure-JAX reference mirroring the PyTorch AttnBlock forward (eval mode)."""
    B, S, D = x.shape
    d_k = D // n_head

    def lin(v, name):
        return v @ params[name + "_w"] + params[name + "_b"]

    def layer_norm(v, a, b):
        mean = v.mean(-1, keepdims=True)
        std = jnp.sqrt(((v - mean) ** 2).sum(-1, keepdims=True) / (D - 1))
        return a * (v - mean) / (std + LN_EPS) + b

    def special_attention(Q, K, V):
        def proj(t, g_name, f_name):
            cls = lin(t[:, :1, :], g_name)
            feat = lin(t[:, 1:, :], f_name)
            y = jnp.concatenate([cls, feat], axis=1)
            return y.reshape(B, S, n_head, d_k).transpose(0, 2, 1, 3)
        q = proj(Q, "q_global", "q_linear")
        k = proj(K, "k_global", "k_linear")
        v = proj(V, "v_global", "v_linear")
        w = jnp.einsum("bhqd,bhkd->bhqk", q, k) / math.sqrt(d_k)
        a = jax.nn.softmax(w, axis=-1)
        o = jnp.einsum("bhqk,bhkd->bhqd", a, v)
        o = o.transpose(0, 2, 1, 3).reshape(B, S, D)
        return lin(o, "out_linear")

    xn = layer_norm(x, params["ln1_a"], params["ln1_b"])
    x1 = x + special_attention(xn, xn, xn)
    yn = layer_norm(x1, params["ln2_a"], params["ln2_b"])
    ffn = jnp.maximum(yn @ params["w1_w"] + params["w1_b"], 0.0) @ params["w2_w"] + params["w2_b"]
    return x1 + ffn


if __name__ == "__main__":
    B, S, D, H, F = 2, 8, 32, 4, 64     # seq = 1 CLS token + 7 feature tokens

    key = jax.random.PRNGKey(0)
    kx, kp = jax.random.split(key)
    x = jax.random.normal(kx, (B, S, D), jnp.float32)
    params = init_params(kp, D, F)

    ref = attn_block_ref(x, params, n_head=H)

    # Default path: bf16 MXU inputs, f32 accumulation (recommended on all
    # generations); tolerance covers bf16 rounding + the EUP approximate
    # reciprocal used for the softmax normalization.
    out_bf16 = jax.block_until_ready(attn_block(x, params, n_head=H))
    assert out_bf16.shape == (B, S, D)
    assert jnp.allclose(out_bf16, ref, atol=6e-2, rtol=6e-2), (
        f"bf16 path max abs err {jnp.max(jnp.abs(out_bf16 - ref))}")

    # f32 MXU path (tolerance covers only the approximate softmax reciprocal).
    out_f32 = jax.block_until_ready(attn_block(x, params, n_head=H, use_bf16_mxu=False))
    assert jnp.allclose(out_f32, ref, atol=2e-2, rtol=2e-2), (
        f"f32 path max abs err {jnp.max(jnp.abs(out_f32 - ref))}")

    print("KERNEL_OK")
</pallas_src>

<mosaic_0001>
module attributes {stable_mosaic.version = 11 : i64} {
  func.func @_attn_block_kernel(%arg0: i32, %arg1: memref<8x32xf32, #tpu.memory_space<vmem>>, %arg2: memref<32x96xbf16, #tpu.memory_space<vmem>>, %arg3: memref<1x96xf32, #tpu.memory_space<vmem>>, %arg4: memref<32x96xbf16, #tpu.memory_space<vmem>>, %arg5: memref<1x96xf32, #tpu.memory_space<vmem>>, %arg6: memref<32x32xbf16, #tpu.memory_space<vmem>>, %arg7: memref<1x32xf32, #tpu.memory_space<vmem>>, %arg8: memref<32x64xbf16, #tpu.memory_space<vmem>>, %arg9: memref<1x64xf32, #tpu.memory_space<vmem>>, %arg10: memref<64x32xbf16, #tpu.memory_space<vmem>>, %arg11: memref<1x32xf32, #tpu.memory_space<vmem>>, %arg12: memref<1x32xf32, #tpu.memory_space<vmem>>, %arg13: memref<1x32xf32, #tpu.memory_space<vmem>>, %arg14: memref<1x32xf32, #tpu.memory_space<vmem>>, %arg15: memref<1x32xf32, #tpu.memory_space<vmem>>, %arg16: memref<8x32xf32, #tpu.memory_space<vmem>>, %arg17: memref<8x32xf32, #tpu.memory_space<vmem>>) attributes {dimension_semantics = [#tpu.dimension_semantics<parallel>], iteration_bounds = array<i64: 2>, scalar_prefetch = 0 : i64, scratch_operands = 1 : i64, tpu.core_type = #tpu.core_type<tc>, window_params = [{transform_indices = @transform_0, window_bounds = array<i64: 8, 32>}, {pipeline_mode = #tpu.pipeline_mode<synchronous>, transform_indices = @transform_1, window_bounds = array<i64: 32, 96>}, {pipeline_mode = #tpu.pipeline_mode<synchronous>, transform_indices = @transform_2, window_bounds = array<i64: 1, 96>}, {pipeline_mode = #tpu.pipeline_mode<synchronous>, transform_indices = @transform_3, window_bounds = array<i64: 32, 96>}, {pipeline_mode = #tpu.pipeline_mode<synchronous>, transform_indices = @transform_4, window_bounds = array<i64: 1, 96>}, {pipeline_mode = #tpu.pipeline_mode<synchronous>, transform_indices = @transform_5, window_bounds = array<i64: 32, 32>}, {pipeline_mode = #tpu.pipeline_mode<synchronous>, transform_indices = @transform_6, window_bounds = array<i64: 1, 32>}, {pipeline_mode = #tpu.pipeline_mode<synchronous>, transform_indices = @transform_7, window_bounds = array<i64: 32, 64>}, {pipeline_mode = #tpu.pipeline_mode<synchronous>, transform_indices = @transform_8, window_bounds = array<i64: 1, 64>}, {pipeline_mode = #tpu.pipeline_mode<synchronous>, transform_indices = @transform_9, window_bounds = array<i64: 64, 32>}, {pipeline_mode = #tpu.pipeline_mode<synchronous>, transform_indices = @transform_10, window_bounds = array<i64: 1, 32>}, {pipeline_mode = #tpu.pipeline_mode<synchronous>, transform_indices = @transform_11, window_bounds = array<i64: 1, 32>}, {pipeline_mode = #tpu.pipeline_mode<synchronous>, transform_indices = @transform_12, window_bounds = array<i64: 1, 32>}, {pipeline_mode = #tpu.pipeline_mode<synchronous>, transform_indices = @transform_13, window_bounds = array<i64: 1, 32>}, {pipeline_mode = #tpu.pipeline_mode<synchronous>, transform_indices = @transform_14, window_bounds = array<i64: 1, 32>}, {transform_indices = @transform_15, window_bounds = array<i64: 8, 32>}]} {
    %c0 = arith.constant 0 : index
    %c0_0 = arith.constant 0 : index
    %0 = vector.load %arg1[%c0, %c0_0] : memref<8x32xf32, #tpu.memory_space<vmem>>, vector<8x32xf32>
    %cst = arith.constant dense<0.000000e+00> : vector<8xf32>
    %1 = vector.multi_reduction <add>, %0, %cst [1] : vector<8x32xf32> to vector<8xf32>
    %2 = vector.shape_cast %1 : vector<8xf32> to vector<8x1xf32>
    %cst_1 = arith.constant 3.200000e+01 : f32
    %3 = vector.broadcast %cst_1 : f32 to vector<8x1xf32>
    %4 = arith.divf %2, %3 : vector<8x1xf32>
    %5 = vector.broadcast %4 : vector<8x1xf32> to vector<8x32xf32>
    %6 = arith.subf %0, %5 : vector<8x32xf32>
    %7 = arith.mulf %6, %6 : vector<8x32xf32>
    %cst_2 = arith.constant dense<0.000000e+00> : vector<8xf32>
    %8 = vector.multi_reduction <add>, %7, %cst_2 [1] : vector<8x32xf32> to vector<8xf32>
    %9 = vector.shape_cast %8 : vector<8xf32> to vector<8x1xf32>
    %cst_3 = arith.constant 0.0322580636 : f32
    %10 = vector.broadcast %cst_3 : f32 to vector<8x1xf32>
    %11 = arith.mulf %9, %10 : vector<8x1xf32>
    %12 = math.sqrt %11 : vector<8x1xf32>
    %cst_4 = arith.constant 9.99999997E-7 : f32
    %13 = vector.broadcast %cst_4 : f32 to vector<8x1xf32>
    %14 = arith.addf %12, %13 : vector<8x1xf32>
    %cst_5 = arith.constant 1.000000e+00 : f32
    %15 = vector.broadcast %cst_5 : f32 to vector<8x1xf32>
    %16 = arith.divf %15, %14 : vector<8x1xf32>
    %c0_6 = arith.constant 0 : index
    %c0_7 = arith.constant 0 : index
    %17 = vector.load %arg12[%c0_6, %c0_7] : memref<1x32xf32, #tpu.memory_space<vmem>>, vector<1x32xf32>
    %18 = vector.broadcast %16 : vector<8x1xf32> to vector<8x32xf32>
    %19 = arith.mulf %6, %18 : vector<8x32xf32>
    %20 = vector.broadcast %17 : vector<1x32xf32> to vector<8x32xf32>
    %21 = arith.mulf %20, %19 : vector<8x32xf32>
    %c0_8 = arith.constant 0 : index
    %c0_9 = arith.constant 0 : index
    %22 = vector.load %arg13[%c0_8, %c0_9] : memref<1x32xf32, #tpu.memory_space<vmem>>, vector<1x32xf32>
    %23 = vector.broadcast %22 : vector<1x32xf32> to vector<8x32xf32>
    %24 = arith.addf %21, %23 : vector<8x32xf32>
    %c0_10 = arith.constant 0 : index
    %c0_11 = arith.constant 0 : index
    %25 = vector.load %arg4[%c0_10, %c0_11] : memref<32x96xbf16, #tpu.memory_space<vmem>>, vector<32x96xbf16>
    %26 = arith.truncf %24 : vector<8x32xf32> to vector<8x32xbf16>
    %cst_12 = arith.constant dense<0.000000e+00> : vector<8x96xf32>
    %27 = tpu.matmul %26, %25, %cst_12 {dimension_numbers = #tpu.dot_dimension_numbers<[1], [0], [0], [1], [0, 0, 1, 1], [], []>} : vector<8x32xbf16>, vector<32x96xbf16>, vector<8x96xf32> -> vector<8x96xf32>
    %c0_13 = arith.constant 0 : index
    %c0_14 = arith.constant 0 : index
    %28 = vector.load %arg5[%c0_13, %c0_14] : memref<1x96xf32, #tpu.memory_space<vmem>>, vector<1x96xf32>
    %29 = vector.broadcast %28 : vector<1x96xf32> to vector<8x96xf32>
    %30 = arith.addf %27, %29 : vector<8x96xf32>
    %31 = vector.shape_cast %24 : vector<8x32xf32> to vector<1x8x32xf32>
    %32 = vector.extract_strided_slice %31 {offsets = [0, 0, 0], sizes = [1, 1, 32], strides = [1, 1, 1]} : vector<1x8x32xf32> to vector<1x1x32xf32>
    %33 = vector.shape_cast %32 : vector<1x1x32xf32> to vector<1x32xf32>
    %c0_15 = arith.constant 0 : index
    %c0_16 = arith.constant 0 : index
    %34 = vector.load %arg2[%c0_15, %c0_16] : memref<32x96xbf16, #tpu.memory_space<vmem>>, vector<32x96xbf16>
    %35 = arith.truncf %33 : vector<1x32xf32> to vector<1x32xbf16>
    %cst_17 = arith.constant dense<0.000000e+00> : vector<1x96xf32>
    %36 = tpu.matmul %35, %34, %cst_17 {dimension_numbers = #tpu.dot_dimension_numbers<[1], [0], [0], [1], [0, 0, 1, 1], [], []>} : vector<1x32xbf16>, vector<32x96xbf16>, vector<1x96xf32> -> vector<1x96xf32>
    %c0_18 = arith.constant 0 : index
    %c0_19 = arith.constant 0 : index
    %37 = vector.load %arg3[%c0_18, %c0_19] : memref<1x96xf32, #tpu.memory_space<vmem>>, vector<1x96xf32>
    %38 = arith.addf %36, %37 : vector<1x96xf32>
    %39 = tpu.iota {dimensions = array<i32: 1>} : vector<1x8x1xi32>
    %c0_i32 = arith.constant 0 : i32
    %40 = vector.broadcast %c0_i32 : i32 to vector<1x8x1xi32>
    %41 = arith.cmpi eq, %39, %40 : vector<1x8x1xi32>
    %42 = vector.extract_strided_slice %30 {offsets = [0, 0], sizes = [8, 32], strides = [1, 1]} : vector<8x96xf32> to vector<8x32xf32>
    %43 = vector.shape_cast %42 : vector<8x32xf32> to vector<1x8x32xf32>
    %44 = vector.extract_strided_slice %38 {offsets = [0, 0], sizes = [1, 32], strides = [1, 1]} : vector<1x96xf32> to vector<1x32xf32>
    %45 = vector.shape_cast %44 : vector<1x32xf32> to vector<1x1x32xf32>
    %46 = vector.shape_cast %41 : vector<1x8x1xi1> to vector<1x8x1xi1>
    %47 = vector.broadcast %46 : vector<1x8x1xi1> to vector<1x8x32xi1>
    %48 = vector.shape_cast %45 : vector<1x1x32xf32> to vector<1x1x32xf32>
    %49 = vector.broadcast %48 : vector<1x1x32xf32> to vector<1x8x32xf32>
    %50 = arith.select %47, %49, %43 : vector<1x8x32xi1>, vector<1x8x32xf32>
    %cst_20 = arith.constant 0.353553385 : f32
    %51 = vector.broadcast %cst_20 : f32 to vector<1x8x32xf32>
    %52 = arith.mulf %50, %51 : vector<1x8x32xf32>
    %53 = vector.extract_strided_slice %30 {offsets = [0, 32], sizes = [8, 32], strides = [1, 1]} : vector<8x96xf32> to vector<8x32xf32>
    %54 = vector.shape_cast %53 : vector<8x32xf32> to vector<1x8x32xf32>
    %55 = vector.extract_strided_slice %38 {offsets = [0, 32], sizes = [1, 32], strides = [1, 1]} : vector<1x96xf32> to vector<1x32xf32>
    %56 = vector.shape_cast %55 : vector<1x32xf32> to vector<1x1x32xf32>
    %57 = vector.shape_cast %41 : vector<1x8x1xi1> to vector<1x8x1xi1>
    %58 = vector.broadcast %57 : vector<1x8x1xi1> to vector<1x8x32xi1>
    %59 = vector.shape_cast %56 : vector<1x1x32xf32> to vector<1x1x32xf32>
    %60 = vector.broadcast %59 : vector<1x1x32xf32> to vector<1x8x32xf32>
    %61 = arith.select %58, %60, %54 : vector<1x8x32xi1>, vector<1x8x32xf32>
    %62 = vector.extract_strided_slice %30 {offsets = [0, 64], sizes = [8, 32], strides = [1, 1]} : vector<8x96xf32> to vector<8x32xf32>
    %63 = vector.shape_cast %62 : vector<8x32xf32> to vector<1x8x32xf32>
    %64 = vector.extract_strided_slice %38 {offsets = [0, 64], sizes = [1, 32], strides = [1, 1]} : vector<1x96xf32> to vector<1x32xf32>
    %65 = vector.shape_cast %64 : vector<1x32xf32> to vector<1x1x32xf32>
    %66 = vector.shape_cast %41 : vector<1x8x1xi1> to vector<1x8x1xi1>
    %67 = vector.broadcast %66 : vector<1x8x1xi1> to vector<1x8x32xi1>
    %68 = vector.shape_cast %65 : vector<1x1x32xf32> to vector<1x1x32xf32>
    %69 = vector.broadcast %68 : vector<1x1x32xf32> to vector<1x8x32xf32>
    %70 = arith.select %67, %69, %63 : vector<1x8x32xi1>, vector<1x8x32xf32>
    %71 = arith.truncf %52 : vector<1x8x32xf32> to vector<1x8x32xbf16>
    %72 = arith.truncf %61 : vector<1x8x32xf32> to vector<1x8x32xbf16>
    %73 = arith.truncf %70 : vector<1x8x32xf32> to vector<1x8x32xbf16>
    %74 = vector.extract_strided_slice %71 {offsets = [0, 0, 0], sizes = [1, 8, 8], strides = [1, 1, 1]} : vector<1x8x32xbf16> to vector<1x8x8xbf16>
    %75 = vector.extract_strided_slice %72 {offsets = [0, 0, 0], sizes = [1, 8, 8], strides = [1, 1, 1]} : vector<1x8x32xbf16> to vector<1x8x8xbf16>
    %76 = vector.extract_strided_slice %73 {offsets = [0, 0, 0], sizes = [1, 8, 8], strides = [1, 1, 1]} : vector<1x8x32xbf16> to vector<1x8x8xbf16>
    "tpu.trace_start"() <{level = 10 : i32, message = "bqd,bkd->bqk"}> : () -> ()
    %cst_21 = arith.constant dense<0.000000e+00> : vector<1x8x8xf32>
    %77 = tpu.matmul %74, %75, %cst_21 {dimension_numbers = #tpu.dot_dimension_numbers<[2], [2], [1], [1], [0, 0, 0, 1, 1, 1], [0], [0]>} : vector<1x8x8xbf16>, vector<1x8x8xbf16>, vector<1x8x8xf32> -> vector<1x8x8xf32>
    "tpu.trace_stop"() : () -> ()
    %cst_22 = arith.constant dense<0xFF800000> : vector<1x8xf32>
    %78 = vector.multi_reduction <maximumf>, %77, %cst_22 [2] : vector<1x8x8xf32> to vector<1x8xf32>
    %79 = vector.shape_cast %78 : vector<1x8xf32> to vector<1x8x1xf32>
    %80 = vector.broadcast %79 : vector<1x8x1xf32> to vector<1x8x8xf32>
    %81 = arith.subf %77, %80 : vector<1x8x8xf32>
    %82 = math.exp %81 : vector<1x8x8xf32>
    %cst_23 = arith.constant dense<0.000000e+00> : vector<1x8xf32>
    %83 = vector.multi_reduction <add>, %82, %cst_23 [2] : vector<1x8x8xf32> to vector<1x8xf32>
    %84 = vector.shape_cast %83 : vector<1x8xf32> to vector<1x8x1xf32>
    %85 = tpu.reciprocal %84 {approx = true} : vector<1x8x1xf32> -> vector<1x8x1xf32>
    %86 = vector.broadcast %85 : vector<1x8x1xf32> to vector<1x8x8xf32>
    %87 = arith.mulf %82, %86 : vector<1x8x8xf32>
    %88 = arith.truncf %87 : vector<1x8x8xf32> to vector<1x8x8xbf16>
    "tpu.trace_start"() <{level = 10 : i32, message = "bqk,bkd->bqd"}> : () -> ()
    %cst_24 = arith.constant dense<0.000000e+00> : vector<1x8x8xf32>
    %89 = tpu.matmul %88, %76, %cst_24 {dimension_numbers = #tpu.dot_dimension_numbers<[2], [1], [1], [2], [0, 0, 0, 1, 1, 2], [0], [0]>} : vector<1x8x8xbf16>, vector<1x8x8xbf16>, vector<1x8x8xf32> -> vector<1x8x8xf32>
    "tpu.trace_stop"() : () -> ()
    %90 = vector.shape_cast %89 : vector<1x8x8xf32> to vector<8x8xf32>
    %c0_25 = arith.constant 0 : index
    %c0_26 = arith.constant 0 : index
    %91 = vector.load %arg17[%c0_25, %c0_26] : memref<8x32xf32, #tpu.memory_space<vmem>>, vector<8x8xf32>
    tpu.vector_store %arg17[%c0_25, %c0_26], %90 {strides = array<i32>} : memref<8x32xf32, #tpu.memory_space<vmem>>, vector<8x8xf32>,
    %92 = vector.extract_strided_slice %71 {offsets = [0, 0, 8], sizes = [1, 8, 8], strides = [1, 1, 1]} : vector<1x8x32xbf16> to vector<1x8x8xbf16>
    %93 = vector.extract_strided_slice %72 {offsets = [0, 0, 8], sizes = [1, 8, 8], strides = [1, 1, 1]} : vector<1x8x32xbf16> to vector<1x8x8xbf16>
    %94 = vector.extract_strided_slice %73 {offsets = [0, 0, 8], sizes = [1, 8, 8], strides = [1, 1, 1]} : vector<1x8x32xbf16> to vector<1x8x8xbf16>
    "tpu.trace_start"() <{level = 10 : i32, message = "bqd,bkd->bqk"}> : () -> ()
    %cst_27 = arith.constant dense<0.000000e+00> : vector<1x8x8xf32>
    %95 = tpu.matmul %92, %93, %cst_27 {dimension_numbers = #tpu.dot_dimension_numbers<[2], [2], [1], [1], [0, 0, 0, 1, 1, 1], [0], [0]>} : vector<1x8x8xbf16>, vector<1x8x8xbf16>, vector<1x8x8xf32> -> vector<1x8x8xf32>
    "tpu.trace_stop"() : () -> ()
    %cst_28 = arith.constant dense<0xFF800000> : vector<1x8xf32>
    %96 = vector.multi_reduction <maximumf>, %95, %cst_28 [2] : vector<1x8x8xf32> to vector<1x8xf32>
    %97 = vector.shape_cast %96 : vector<1x8xf32> to vector<1x8x1xf32>
    %98 = vector.broadcast %97 : vector<1x8x1xf32> to vector<1x8x8xf32>
    %99 = arith.subf %95, %98 : vector<1x8x8xf32>
    %100 = math.exp %99 : vector<1x8x8xf32>
    %cst_29 = arith.constant dense<0.000000e+00> : vector<1x8xf32>
    %101 = vector.multi_reduction <add>, %100, %cst_29 [2] : vector<1x8x8xf32> to vector<1x8xf32>
    %102 = vector.shape_cast %101 : vector<1x8xf32> to vector<1x8x1xf32>
    %103 = tpu.reciprocal %102 {approx = true} : vector<1x8x1xf32> -> vector<1x8x1xf32>
    %104 = vector.broadcast %103 : vector<1x8x1xf32> to vector<1x8x8xf32>
    %105 = arith.mulf %100, %104 : vector<1x8x8xf32>
    %106 = arith.truncf %105 : vector<1x8x8xf32> to vector<1x8x8xbf16>
    "tpu.trace_start"() <{level = 10 : i32, message = "bqk,bkd->bqd"}> : () -> ()
    %cst_30 = arith.constant dense<0.000000e+00> : vector<1x8x8xf32>
    %107 = tpu.matmul %106, %94, %cst_30 {dimension_numbers = #tpu.dot_dimension_numbers<[2], [1], [1], [2], [0, 0, 0, 1, 1, 2], [0], [0]>} : vector<1x8x8xbf16>, vector<1x8x8xbf16>, vector<1x8x8xf32> -> vector<1x8x8xf32>
    "tpu.trace_stop"() : () -> ()
    %108 = vector.shape_cast %107 : vector<1x8x8xf32> to vector<8x8xf32>
    %c0_31 = arith.constant 0 : index
    %c8 = arith.constant 8 : index
    %109 = vector.load %arg17[%c0_31, %c8] : memref<8x32xf32, #tpu.memory_space<vmem>>, vector<8x8xf32>
    tpu.vector_store %arg17[%c0_31, %c8], %108 {strides = array<i32>} : memref<8x32xf32, #tpu.memory_space<vmem>>, vector<8x8xf32>,
    %110 = vector.extract_strided_slice %71 {offsets = [0, 0, 16], sizes = [1, 8, 8], strides = [1, 1, 1]} : vector<1x8x32xbf16> to vector<1x8x8xbf16>
    %111 = vector.extract_strided_slice %72 {offsets = [0, 0, 16], sizes = [1, 8, 8], strides = [1, 1, 1]} : vector<1x8x32xbf16> to vector<1x8x8xbf16>
    %112 = vector.extract_strided_slice %73 {offsets = [0, 0, 16], sizes = [1, 8, 8], strides = [1, 1, 1]} : vector<1x8x32xbf16> to vector<1x8x8xbf16>
    "tpu.trace_start"() <{level = 10 : i32, message = "bqd,bkd->bqk"}> : () -> ()
    %cst_32 = arith.constant dense<0.000000e+00> : vector<1x8x8xf32>
    %113 = tpu.matmul %110, %111, %cst_32 {dimension_numbers = #tpu.dot_dimension_numbers<[2], [2], [1], [1], [0, 0, 0, 1, 1, 1], [0], [0]>} : vector<1x8x8xbf16>, vector<1x8x8xbf16>, vector<1x8x8xf32> -> vector<1x8x8xf32>
    "tpu.trace_stop"() : () -> ()
    %cst_33 = arith.constant dense<0xFF800000> : vector<1x8xf32>
    %114 = vector.multi_reduction <maximumf>, %113, %cst_33 [2] : vector<1x8x8xf32> to vector<1x8xf32>
    %115 = vector.shape_cast %114 : vector<1x8xf32> to vector<1x8x1xf32>
    %116 = vector.broadcast %115 : vector<1x8x1xf32> to vector<1x8x8xf32>
    %117 = arith.subf %113, %116 : vector<1x8x8xf32>
    %118 = math.exp %117 : vector<1x8x8xf32>
    %cst_34 = arith.constant dense<0.000000e+00> : vector<1x8xf32>
    %119 = vector.multi_reduction <add>, %118, %cst_34 [2] : vector<1x8x8xf32> to vector<1x8xf32>
    %120 = vector.shape_cast %119 : vector<1x8xf32> to vector<1x8x1xf32>
    %121 = tpu.reciprocal %120 {approx = true} : vector<1x8x1xf32> -> vector<1x8x1xf32>
    %122 = vector.broadcast %121 : vector<1x8x1xf32> to vector<1x8x8xf32>
    %123 = arith.mulf %118, %122 : vector<1x8x8xf32>
    %124 = arith.truncf %123 : vector<1x8x8xf32> to vector<1x8x8xbf16>
    "tpu.trace_start"() <{level = 10 : i32, message = "bqk,bkd->bqd"}> : () -> ()
    %cst_35 = arith.constant dense<0.000000e+00> : vector<1x8x8xf32>
    %125 = tpu.matmul %124, %112, %cst_35 {dimension_numbers = #tpu.dot_dimension_numbers<[2], [1], [1], [2], [0, 0, 0, 1, 1, 2], [0], [0]>} : vector<1x8x8xbf16>, vector<1x8x8xbf16>, vector<1x8x8xf32> -> vector<1x8x8xf32>
    "tpu.trace_stop"() : () -> ()
    %126 = vector.shape_cast %125 : vector<1x8x8xf32> to vector<8x8xf32>
    %c0_36 = arith.constant 0 : index
    %c16 = arith.constant 16 : index
    %127 = vector.load %arg17[%c0_36, %c16] : memref<8x32xf32, #tpu.memory_space<vmem>>, vector<8x8xf32>
    tpu.vector_store %arg17[%c0_36, %c16], %126 {strides = array<i32>} : memref<8x32xf32, #tpu.memory_space<vmem>>, vector<8x8xf32>,
    %128 = vector.extract_strided_slice %71 {offsets = [0, 0, 24], sizes = [1, 8, 8], strides = [1, 1, 1]} : vector<1x8x32xbf16> to vector<1x8x8xbf16>
    %129 = vector.extract_strided_slice %72 {offsets = [0, 0, 24], sizes = [1, 8, 8], strides = [1, 1, 1]} : vector<1x8x32xbf16> to vector<1x8x8xbf16>
    %130 = vector.extract_strided_slice %73 {offsets = [0, 0, 24], sizes = [1, 8, 8], strides = [1, 1, 1]} : vector<1x8x32xbf16> to vector<1x8x8xbf16>
    "tpu.trace_start"() <{level = 10 : i32, message = "bqd,bkd->bqk"}> : () -> ()
    %cst_37 = arith.constant dense<0.000000e+00> : vector<1x8x8xf32>
    %131 = tpu.matmul %128, %129, %cst_37 {dimension_numbers = #tpu.dot_dimension_numbers<[2], [2], [1], [1], [0, 0, 0, 1, 1, 1], [0], [0]>} : vector<1x8x8xbf16>, vector<1x8x8xbf16>, vector<1x8x8xf32> -> vector<1x8x8xf32>
    "tpu.trace_stop"() : () -> ()
    %cst_38 = arith.constant dense<0xFF800000> : vector<1x8xf32>
    %132 = vector.multi_reduction <maximumf>, %131, %cst_38 [2] : vector<1x8x8xf32> to vector<1x8xf32>
    %133 = vector.shape_cast %132 : vector<1x8xf32> to vector<1x8x1xf32>
    %134 = vector.broadcast %133 : vector<1x8x1xf32> to vector<1x8x8xf32>
    %135 = arith.subf %131, %134 : vector<1x8x8xf32>
    %136 = math.exp %135 : vector<1x8x8xf32>
    %cst_39 = arith.constant dense<0.000000e+00> : vector<1x8xf32>
    %137 = vector.multi_reduction <add>, %136, %cst_39 [2] : vector<1x8x8xf32> to vector<1x8xf32>
    %138 = vector.shape_cast %137 : vector<1x8xf32> to vector<1x8x1xf32>
    %139 = tpu.reciprocal %138 {approx = true} : vector<1x8x1xf32> -> vector<1x8x1xf32>
    %140 = vector.broadcast %139 : vector<1x8x1xf32> to vector<1x8x8xf32>
    %141 = arith.mulf %136, %140 : vector<1x8x8xf32>
    %142 = arith.truncf %141 : vector<1x8x8xf32> to vector<1x8x8xbf16>
    "tpu.trace_start"() <{level = 10 : i32, message = "bqk,bkd->bqd"}> : () -> ()
    %cst_40 = arith.constant dense<0.000000e+00> : vector<1x8x8xf32>
    %143 = tpu.matmul %142, %130, %cst_40 {dimension_numbers = #tpu.dot_dimension_numbers<[2], [1], [1], [2], [0, 0, 0, 1, 1, 2], [0], [0]>} : vector<1x8x8xbf16>, vector<1x8x8xbf16>, vector<1x8x8xf32> -> vector<1x8x8xf32>
    "tpu.trace_stop"() : () -> ()
    %144 = vector.shape_cast %143 : vector<1x8x8xf32> to vector<8x8xf32>
    %c0_41 = arith.constant 0 : index
    %c24 = arith.constant 24 : index
    %145 = vector.load %arg17[%c0_41, %c24] : memref<8x32xf32, #tpu.memory_space<vmem>>, vector<8x8xf32>
    tpu.vector_store %arg17[%c0_41, %c24], %144 {strides = array<i32>} : memref<8x32xf32, #tpu.memory_space<vmem>>, vector<8x8xf32>,
    %c0_42 = arith.constant 0 : index
    %c0_43 = arith.constant 0 : index
    %146 = vector.load %arg17[%c0_42, %c0_43] : memref<8x32xf32, #tpu.memory_space<vmem>>, vector<8x32xf32>
    %c0_44 = arith.constant 0 : index
    %c0_45 = arith.constant 0 : index
    %147 = vector.load %arg6[%c0_44, %c0_45] : memref<32x32xbf16, #tpu.memory_space<vmem>>, vector<32x32xbf16>
    %148 = arith.truncf %146 : vector<8x32xf32> to vector<8x32xbf16>
    %cst_46 = arith.constant dense<0.000000e+00> : vector<8x32xf32>
    %149 = tpu.matmul %148, %147, %cst_46 {dimension_numbers = #tpu.dot_dimension_numbers<[1], [0], [0], [1], [0, 0, 1, 1], [], []>} : vector<8x32xbf16>, vector<32x32xbf16>, vector<8x32xf32> -> vector<8x32xf32>
    %150 = arith.addf %0, %149 : vector<8x32xf32>
    %c0_47 = arith.constant 0 : index
    %c0_48 = arith.constant 0 : index
    %151 = vector.load %arg7[%c0_47, %c0_48] : memref<1x32xf32, #tpu.memory_space<vmem>>, vector<1x32xf32>
    %152 = vector.broadcast %151 : vector<1x32xf32> to vector<8x32xf32>
    %153 = arith.addf %150, %152 : vector<8x32xf32>
    %cst_49 = arith.constant dense<0.000000e+00> : vector<8xf32>
    %154 = vector.multi_reduction <add>, %153, %cst_49 [1] : vector<8x32xf32> to vector<8xf32>
    %155 = vector.shape_cast %154 : vector<8xf32> to vector<8x1xf32>
    %cst_50 = arith.constant 3.200000e+01 : f32
    %156 = vector.broadcast %cst_50 : f32 to vector<8x1xf32>
    %157 = arith.divf %155, %156 : vector<8x1xf32>
    %158 = vector.broadcast %157 : vector<8x1xf32> to vector<8x32xf32>
    %159 = arith.subf %153, %158 : vector<8x32xf32>
    %160 = arith.mulf %159, %159 : vector<8x32xf32>
    %cst_51 = arith.constant dense<0.000000e+00> : vector<8xf32>
    %161 = vector.multi_reduction <add>, %160, %cst_51 [1] : vector<8x32xf32> to vector<8xf32>
    %162 = vector.shape_cast %161 : vector<8xf32> to vector<8x1xf32>
    %cst_52 = arith.constant 0.0322580636 : f32
    %163 = vector.broadcast %cst_52 : f32 to vector<8x1xf32>
    %164 = arith.mulf %162, %163 : vector<8x1xf32>
    %165 = math.sqrt %164 : vector<8x1xf32>
    %cst_53 = arith.constant 9.99999997E-7 : f32
    %166 = vector.broadcast %cst_53 : f32 to vector<8x1xf32>
    %167 = arith.addf %165, %166 : vector<8x1xf32>
    %cst_54 = arith.constant 1.000000e+00 : f32
    %168 = vector.broadcast %cst_54 : f32 to vector<8x1xf32>
    %169 = arith.divf %168, %167 : vector<8x1xf32>
    %c0_55 = arith.constant 0 : index
    %c0_56 = arith.constant 0 : index
    %170 = vector.load %arg14[%c0_55, %c0_56] : memref<1x32xf32, #tpu.memory_space<vmem>>, vector<1x32xf32>
    %171 = vector.broadcast %169 : vector<8x1xf32> to vector<8x32xf32>
    %172 = arith.mulf %159, %171 : vector<8x32xf32>
    %173 = vector.broadcast %170 : vector<1x32xf32> to vector<8x32xf32>
    %174 = arith.mulf %173, %172 : vector<8x32xf32>
    %c0_57 = arith.constant 0 : index
    %c0_58 = arith.constant 0 : index
    %175 = vector.load %arg15[%c0_57, %c0_58] : memref<1x32xf32, #tpu.memory_space<vmem>>, vector<1x32xf32>
    %176 = vector.broadcast %175 : vector<1x32xf32> to vector<8x32xf32>
    %177 = arith.addf %174, %176 : vector<8x32xf32>
    %c0_59 = arith.constant 0 : index
    %c0_60 = arith.constant 0 : index
    %178 = vector.load %arg8[%c0_59, %c0_60] : memref<32x64xbf16, #tpu.memory_space<vmem>>, vector<32x64xbf16>
    %179 = arith.truncf %177 : vector<8x32xf32> to vector<8x32xbf16>
    %cst_61 = arith.constant dense<0.000000e+00> : vector<8x64xf32>
    %180 = tpu.matmul %179, %178, %cst_61 {dimension_numbers = #tpu.dot_dimension_numbers<[1], [0], [0], [1], [0, 0, 1, 1], [], []>} : vector<8x32xbf16>, vector<32x64xbf16>, vector<8x64xf32> -> vector<8x64xf32>
    %c0_62 = arith.constant 0 : index
    %c0_63 = arith.constant 0 : index
    %181 = vector.load %arg9[%c0_62, %c0_63] : memref<1x64xf32, #tpu.memory_space<vmem>>, vector<1x64xf32>
    %182 = vector.broadcast %181 : vector<1x64xf32> to vector<8x64xf32>
    %183 = arith.addf %180, %182 : vector<8x64xf32>
    %cst_64 = arith.constant 0.000000e+00 : f32
    %184 = vector.broadcast %cst_64 : f32 to vector<8x64xf32>
    %185 = arith.maximumf %183, %184 : vector<8x64xf32>
    %c0_65 = arith.constant 0 : index
    %c0_66 = arith.constant 0 : index
    %186 = vector.load %arg10[%c0_65, %c0_66] : memref<64x32xbf16, #tpu.memory_space<vmem>>, vector<64x32xbf16>
    %187 = arith.truncf %185 : vector<8x64xf32> to vector<8x64xbf16>
    %cst_67 = arith.constant dense<0.000000e+00> : vector<8x32xf32>
    %188 = tpu.matmul %187, %186, %cst_67 {dimension_numbers = #tpu.dot_dimension_numbers<[1], [0], [0], [1], [0, 0, 1, 1], [], []>} : vector<8x64xbf16>, vector<64x32xbf16>, vector<8x32xf32> -> vector<8x32xf32>
    %189 = arith.addf %153, %188 : vector<8x32xf32>
    %c0_68 = arith.constant 0 : index
    %c0_69 = arith.constant 0 : index
    %190 = vector.load %arg11[%c0_68, %c0_69] : memref<1x32xf32, #tpu.memory_space<vmem>>, vector<1x32xf32>
    %191 = vector.broadcast %190 : vector<1x32xf32> to vector<8x32xf32>
    %192 = arith.addf %189, %191 : vector<8x32xf32>
    %c0_70 = arith.constant 0 : index
    %c0_71 = arith.constant 0 : index
    %193 = vector.load %arg16[%c0_70, %c0_71] : memref<8x32xf32, #tpu.memory_space<vmem>>, vector<8x32xf32>
    tpu.vector_store %arg16[%c0_70, %c0_71], %192 {strides = array<i32>} : memref<8x32xf32, #tpu.memory_space<vmem>>, vector<8x32xf32>,
    return
  }
  func.func @transform_0(%arg0: i32) -> (i32, i32) {
    %c0_i32 = arith.constant 0 : i32
    %c0_i32_0 = arith.constant 0 : i32
    return %arg0, %c0_i32 : i32, i32
  }
  func.func @transform_1(%arg0: i32) -> (i32, i32) {
    %c0_i32 = arith.constant 0 : i32
    %c0_i32_0 = arith.constant 0 : i32
    %c0_i32_1 = arith.constant 0 : i32
    return %c0_i32, %c0_i32_0 : i32, i32
  }
  func.func @transform_2(%arg0: i32) -> (i32, i32) {
    %c0_i32 = arith.constant 0 : i32
    %c0_i32_0 = arith.constant 0 : i32
    %c0_i32_1 = arith.constant 0 : i32
    return %c0_i32, %c0_i32_0 : i32, i32
  }
  func.func @transform_3(%arg0: i32) -> (i32, i32) {
    %c0_i32 = arith.constant 0 : i32
    %c0_i32_0 = arith.constant 0 : i32
    %c0_i32_1 = arith.constant 0 : i32
    return %c0_i32, %c0_i32_0 : i32, i32
  }
  func.func @transform_4(%arg0: i32) -> (i32, i32) {
    %c0_i32 = arith.constant 0 : i32
    %c0_i32_0 = arith.constant 0 : i32
    %c0_i32_1 = arith.constant 0 : i32
    return %c0_i32, %c0_i32_0 : i32, i32
  }
  func.func @transform_5(%arg0: i32) -> (i32, i32) {
    %c0_i32 = arith.constant 0 : i32
    %c0_i32_0 = arith.constant 0 : i32
    %c0_i32_1 = arith.constant 0 : i32
    return %c0_i32, %c0_i32_0 : i32, i32
  }
  func.func @transform_6(%arg0: i32) -> (i32, i32) {
    %c0_i32 = arith.constant 0 : i32
    %c0_i32_0 = arith.constant 0 : i32
    %c0_i32_1 = arith.constant 0 : i32
    return %c0_i32, %c0_i32_0 : i32, i32
  }
  func.func @transform_7(%arg0: i32) -> (i32, i32) {
    %c0_i32 = arith.constant 0 : i32
    %c0_i32_0 = arith.constant 0 : i32
    %c0_i32_1 = arith.constant 0 : i32
    return %c0_i32, %c0_i32_0 : i32, i32
  }
  func.func @transform_8(%arg0: i32) -> (i32, i32) {
    %c0_i32 = arith.constant 0 : i32
    %c0_i32_0 = arith.constant 0 : i32
    %c0_i32_1 = arith.constant 0 : i32
    return %c0_i32, %c0_i32_0 : i32, i32
  }
  func.func @transform_9(%arg0: i32) -> (i32, i32) {
    %c0_i32 = arith.constant 0 : i32
    %c0_i32_0 = arith.constant 0 : i32
    %c0_i32_1 = arith.constant 0 : i32
    return %c0_i32, %c0_i32_0 : i32, i32
  }
  func.func @transform_10(%arg0: i32) -> (i32, i32) {
    %c0_i32 = arith.constant 0 : i32
    %c0_i32_0 = arith.constant 0 : i32
    %c0_i32_1 = arith.constant 0 : i32
    return %c0_i32, %c0_i32_0 : i32, i32
  }
  func.func @transform_11(%arg0: i32) -> (i32, i32) {
    %c0_i32 = arith.constant 0 : i32
    %c0_i32_0 = arith.constant 0 : i32
    %c0_i32_1 = arith.constant 0 : i32
    return %c0_i32, %c0_i32_0 : i32, i32
  }
  func.func @transform_12(%arg0: i32) -> (i32, i32) {
    %c0_i32 = arith.constant 0 : i32
    %c0_i32_0 = arith.constant 0 : i32
    %c0_i32_1 = arith.constant 0 : i32
    return %c0_i32, %c0_i32_0 : i32, i32
  }
  func.func @transform_13(%arg0: i32) -> (i32, i32) {
    %c0_i32 = arith.constant 0 : i32
    %c0_i32_0 = arith.constant 0 : i32
    %c0_i32_1 = arith.constant 0 : i32
    return %c0_i32, %c0_i32_0 : i32, i32
  }
  func.func @transform_14(%arg0: i32) -> (i32, i32) {
    %c0_i32 = arith.constant 0 : i32
    %c0_i32_0 = arith.constant 0 : i32
    %c0_i32_1 = arith.constant 0 : i32
    return %c0_i32, %c0_i32_0 : i32, i32
  }
  func.func @transform_15(%arg0: i32) -> (i32, i32) {
    %c0_i32 = arith.constant 0 : i32
    %c0_i32_0 = arith.constant 0 : i32
    return %arg0, %c0_i32 : i32, i32
  }
}

</mosaic_0001>

<llo_original>
// kernel: tpu_custom_call.1
$region0: #{tpu_custom_call.1}
  #allocation0 [shape = 'u32[]', space=smem, size = 0x4, offset = 0x4, fixed_abs, tag = 'smem constant byte address 0x4 - core index']
  #allocation1 [shape = 'u32[144,128]{1,0:T(1,128)}', space=vmem, size = 0x12000, scoped, tag = 'internal scratch']
  #allocation2 [shape = 'f32[8,32]{1,0:T(8,128)}', space=vmem, size = 0x1000, scoped, tag = 'scratch operand']
  %s0 = inlined_call_operand.vmem [shape: f32[16,32], index: 0, kind: input, shape index: {}]
  %s1 = inlined_call_operand.vmem [shape: bf16[32,96], index: 1, kind: input, shape index: {}]
  %s2 = inlined_call_operand.vmem [shape: f32[1,96], index: 2, kind: input, shape index: {}]
  %s3 = inlined_call_operand.vmem [shape: bf16[32,96], index: 3, kind: input, shape index: {}]
  %s4 = inlined_call_operand.vmem [shape: f32[1,96], index: 4, kind: input, shape index: {}]
  %s5 = inlined_call_operand.hbm [shape: bf16[32,32], index: 5, kind: input, shape index: {}]
  %s6 = inlined_call_operand.vmem [shape: f32[1,32], index: 6, kind: input, shape index: {}]
  %s7 = inlined_call_operand.hbm [shape: bf16[32,64], index: 7, kind: input, shape index: {}]
  %s8 = inlined_call_operand.vmem [shape: f32[1,64], index: 8, kind: input, shape index: {}]
  %s9 = inlined_call_operand.vmem [shape: bf16[64,32], index: 9, kind: input, shape index: {}]
  %s10 = inlined_call_operand.vmem [shape: f32[1,32], index: 10, kind: input, shape index: {}]
  %s11 = inlined_call_operand.vmem [shape: f32[1,32], index: 11, kind: input, shape index: {}]
  %s12 = inlined_call_operand.vmem [shape: f32[1,32], index: 12, kind: input, shape index: {}]
  %s13 = inlined_call_operand.vmem [shape: f32[1,32], index: 13, kind: input, shape index: {}]
  %s14 = inlined_call_operand.vmem [shape: f32[1,32], index: 14, kind: input, shape index: {}]
  %s15 = inlined_call_operand.hbm [shape: f32[16,32], index: 15, kind: output, shape index: {}]
  %s16 = sld [smem:[#allocation0]]
  $region101: #{tpu_custom_call.1} parent=0
    _
  %s18 = ssub.s32 1, %s16
  %s19 = scalar_select 0, %s18, %s16
  $region1: #{tpu_custom_call.1} parent=0
    #allocation3 [shape = 'u8[8192]{0}', space=vmem, size = 0x2000, scoped, tag = 'input window, operand 5, single buffered']
    #allocation4 [shape = 's32[2]{0}', space=sflag, size = 0x8, scoped, tag = 'scoped memory for tpu_custom_call.1']
    #allocation5 [shape = 's32[2]{0}', space=sflag, size = 0x8, scoped, tag = 'scoped memory for tpu_custom_call.1']
    #allocation6 [shape = 'u8[8192]{0}', space=vmem, size = 0x2000, scoped, tag = 'input window, operand 7, single buffered']
    #allocation7 [shape = 's32[1]{0}', space=sflag, size = 0x4, scoped, tag = 'scoped memory for tpu_custom_call.1']
    #allocation8 [shape = 'u8[8192]{0}', space=vmem, size = 0x2000, scoped, tag = 'output window, operand 0']
    %20 = vsyncpa [#allocation4], 0
    %21 = vsyncpa [#allocation7], 0
    %22 = vsyncpa [#allocation5], 0
    %s23 = scalar_lea.sflag [#allocation5], 1
    %24 = vsyncpa %s23, 0
    loop: start=0, step=1, limit=4
    $region2: #{tpu_custom_call.1} parent=1 // loop_pre_header
      _
    $region3: #{tpu_custom_call.1} parent=1 // loop_header
      %s26 = sphi 0, %s30
      %p27 = scmp.ge.s32.totalorder %s26, 4
      %s36 = sphi 0, %s38
      %s39 = sphi 0, %s36
      %s40 = sphi 0, %s39
      %s56 = sphi 0, %s40
      %s60 = sphi 0, %s60
      %s62 = sphi 0, %s60
      %s63 = sphi 0, %s62
      %s77 = sphi 0, %s63
      %s81 = sphi 0, %s81
      %s83 = sphi 0, %s81
      %s84 = sphi 0, %s83
      %s98 = sphi 0, %s84
      %s102 = sphi 0, %s102
      %s104 = sphi 0, %s102
      %s105 = sphi 0, %s104
      %s119 = sphi 0, %s105
      %s123 = sphi 0, %s123
      %s125 = sphi 0, %s123
      %s126 = sphi 0, %s125
      %s140 = sphi 0, %s126
      %s144 = sphi 0, %s144
      %s146 = sphi 0, %s144
      %s147 = sphi 0, %s146
      %s161 = sphi 0, %s147
      %s165 = sphi 0, %s165
      %s167 = sphi 0, %s165
      %s168 = sphi 0, %s167
      %s182 = sphi 0, %s168
      %s186 = sphi 0, %s186
      %s188 = sphi 0, %s186
      %s189 = sphi 0, %s188
      %s203 = sphi 0, %s189
      %s207 = sphi 0, %s207
      %s209 = sphi 0, %s207
      %s210 = sphi 0, %s209
      %s224 = sphi 0, %s210
      %s228 = sphi 0, %s228
      %s230 = sphi 0, %s228
      %s231 = sphi 0, %s230
      %s245 = sphi 0, %s231
      %s249 = sphi 0, %s249
      %s251 = sphi 0, %s249
      %s252 = sphi 0, %s251
      %s266 = sphi 0, %s252
      %s270 = sphi 0, %s270
      %s272 = sphi 0, %s270
      %s273 = sphi 0, %s272
      %s287 = sphi 0, %s273
      %s291 = sphi 0, %s291
      %s293 = sphi 0, %s291
      %s294 = sphi 0, %s293
      %s308 = sphi 0, %s294
      %s312 = sphi 0, %s312
      %s314 = sphi 0, %s312
      %s315 = sphi 0, %s314
      %s329 = sphi 0, %s315
      %s333 = sphi 0, %s333
      %s335 = sphi 0, %s333
      %s336 = sphi 0, %s335
      %s350 = sphi 0, %s336
      %s356 = sphi 0, %s358
      %s359 = sphi 0, %s356
      %s360 = sphi 0, %s359
      %s376 = sphi 0, %s360
    $region4: #{tpu_custom_call.1} parent=1 // loop_header_branch
      %29 = sbr.rel (%p27) target = $region8
    $region5: #{tpu_custom_call.1} parent=1 // loop_body
      %s31 = ssub.s32 %s26, 1
      %s32 = ssub.s32 %s26, 2
      %s33 = sadd.s32 %s26, 1
      %s34 = ssub.s32 %s26, %s33
      %p35 = scmp.eq.s32.totalorder %s34, 0
      %s37 = sadd.s32 %s36, 1
      %s38 = scalar_select %p35, %s36, %s37
      %p41 = pneg %p35
      %p42 = scmp.eq.s32.totalorder %s26, 1
      %p43 = por %p41, %p42
      %p44 = scmp.ne.s32.totalorder %s36, %s39
      %p45 = scmp.eq.s32.totalorder %s26, 0
      %p46 = por %p44, %p45
      %p47 = scmp.ne.s32.totalorder %s36, %s39
      %p48 = scmp.eq.s32.totalorder %s31, 1
      %p49 = por %p47, %p48
      %p50 = scmp.ne.s32.totalorder %s39, %s40
      %p51 = scmp.eq.s32.totalorder %s31, 0
      %p52 = por %p50, %p51
      %p53 = scmp.ne.s32.totalorder %s39, %s40
      %p54 = scmp.eq.s32.totalorder %s32, 1
      %p55 = por %p53, %p54
      %p57 = scmp.ne.s32.totalorder %s40, %s56
      %p58 = scmp.eq.s32.totalorder %s32, 0
      %p59 = por %p57, %p58
      %s61 = sadd.s32 %s60, 1
      %p64 = scmp.eq.s32.totalorder %s26, 1
      %p65 = scmp.ne.s32.totalorder %s60, %s62
      %p66 = scmp.eq.s32.totalorder %s26, 0
      %p67 = por %p65, %p66
      %p68 = scmp.ne.s32.totalorder %s60, %s62
      %p69 = scmp.eq.s32.totalorder %s31, 1
      %p70 = por %p68, %p69
      %p71 = scmp.ne.s32.totalorder %s62, %s63
      %p72 = scmp.eq.s32.totalorder %s31, 0
      %p73 = por %p71, %p72
      %p74 = scmp.ne.s32.totalorder %s62, %s63
      %p75 = scmp.eq.s32.totalorder %s32, 1
      %p76 = por %p74, %p75
      %p78 = scmp.ne.s32.totalorder %s63, %s77
      %p79 = scmp.eq.s32.totalorder %s32, 0
      %p80 = por %p78, %p79
      %s82 = sadd.s32 %s81, 1
      %p85 = scmp.eq.s32.totalorder %s26, 1
      %p86 = scmp.ne.s32.totalorder %s81, %s83
      %p87 = scmp.eq.s32.totalorder %s26, 0
      %p88 = por %p86, %p87
      %p89 = scmp.ne.s32.totalorder %s81, %s83
      %p90 = scmp.eq.s32.totalorder %s31, 1
      %p91 = por %p89, %p90
      %p92 = scmp.ne.s32.totalorder %s83, %s84
      %p93 = scmp.eq.s32.totalorder %s31, 0
      %p94 = por %p92, %p93
      %p95 = scmp.ne.s32.totalorder %s83, %s84
      %p96 = scmp.eq.s32.totalorder %s32, 1
      %p97 = por %p95, %p96
      %p99 = scmp.ne.s32.totalorder %s84, %s98
      %p100 = scmp.eq.s32.totalorder %s32, 0
      %p101 = por %p99, %p100
      %s103 = sadd.s32 %s102, 1
      %p106 = scmp.eq.s32.totalorder %s26, 1
      %p107 = scmp.ne.s32.totalorder %s102, %s104
      %p108 = scmp.eq.s32.totalorder %s26, 0
      %p109 = por %p107, %p108
      %p110 = scmp.ne.s32.totalorder %s102, %s104
      %p111 = scmp.eq.s32.totalorder %s31, 1
      %p112 = por %p110, %p111
      %p113 = scmp.ne.s32.totalorder %s104, %s105
      %p114 = scmp.eq.s32.totalorder %s31, 0
      %p115 = por %p113, %p114
      %p116 = scmp.ne.s32.totalorder %s104, %s105
      %p117 = scmp.eq.s32.totalorder %s32, 1
      %p118 = por %p116, %p117
      %p120 = scmp.ne.s32.totalorder %s105, %s119
      %p121 = scmp.eq.s32.totalorder %s32, 0
      %p122 = por %p120, %p121
      %s124 = sadd.s32 %s123, 1
      %p127 = scmp.eq.s32.totalorder %s26, 1
      %p128 = scmp.ne.s32.totalorder %s123, %s125
      %p129 = scmp.eq.s32.totalorder %s26, 0
      %p130 = por %p128, %p129
      %p131 = scmp.ne.s32.totalorder %s123, %s125
      %p132 = scmp.eq.s32.totalorder %s31, 1
      %p133 = por %p131, %p132
      %p134 = scmp.ne.s32.totalorder %s125, %s126
      %p135 = scmp.eq.s32.totalorder %s31, 0
      %p136 = por %p134, %p135
      %p137 = scmp.ne.s32.totalorder %s125, %s126
      %p138 = scmp.eq.s32.totalorder %s32, 1
      %p139 = por %p137, %p138
      %p141 = scmp.ne.s32.totalorder %s126, %s140
      %p142 = scmp.eq.s32.totalorder %s32, 0
      %p143 = por %p141, %p142
      %s145 = sadd.s32 %s144, 1
      %p148 = scmp.eq.s32.totalorder %s26, 1
      %p149 = scmp.ne.s32.totalorder %s144, %s146
      %p150 = scmp.eq.s32.totalorder %s26, 0
      %p151 = por %p149, %p150
      %p152 = scmp.ne.s32.totalorder %s144, %s146
      %p153 = scmp.eq.s32.totalorder %s31, 1
      %p154 = por %p152, %p153
      %p155 = scmp.ne.s32.totalorder %s146, %s147
      %p156 = scmp.eq.s32.totalorder %s31, 0
      %p157 = por %p155, %p156
      %p158 = scmp.ne.s32.totalorder %s146, %s147
      %p159 = scmp.eq.s32.totalorder %s32, 1
      %p160 = por %p158, %p159
      %p162 = scmp.ne.s32.totalorder %s147, %s161
      %p163 = scmp.eq.s32.totalorder %s32, 0
      %p164 = por %p162, %p163
      %s166 = sadd.s32 %s165, 1
      %p169 = scmp.eq.s32.totalorder %s26, 1
      %p170 = scmp.ne.s32.totalorder %s165, %s167
      %p171 = scmp.eq.s32.totalorder %s26, 0
      %p172 = por %p170, %p171
      %p173 = scmp.ne.s32.totalorder %s165, %s167
      %p174 = scmp.eq.s32.totalorder %s31, 1
      %p175 = por %p173, %p174
      %p176 = scmp.ne.s32.totalorder %s167, %s168
      %p177 = scmp.eq.s32.totalorder %s31, 0
      %p178 = por %p176, %p177
      %p179 = scmp.ne.s32.totalorder %s167, %s168
      %p180 = scmp.eq.s32.totalorder %s32, 1
      %p181 = por %p179, %p180
      %p183 = scmp.ne.s32.totalorder %s168, %s182
      %p184 = scmp.eq.s32.totalorder %s32, 0
      %p185 = por %p183, %p184
      %s187 = sadd.s32 %s186, 1
      %p190 = scmp.eq.s32.totalorder %s26, 1
      %p191 = scmp.ne.s32.totalorder %s186, %s188
      %p192 = scmp.eq.s32.totalorder %s26, 0
      %p193 = por %p191, %p192
      %p194 = scmp.ne.s32.totalorder %s186, %s188
      %p195 = scmp.eq.s32.totalorder %s31, 1
      %p196 = por %p194, %p195
      %p197 = scmp.ne.s32.totalorder %s188, %s189
      %p198 = scmp.eq.s32.totalorder %s31, 0
      %p199 = por %p197, %p198
      %p200 = scmp.ne.s32.totalorder %s188, %s189
      %p201 = scmp.eq.s32.totalorder %s32, 1
      %p202 = por %p200, %p201
      %p204 = scmp.ne.s32.totalorder %s189, %s203
      %p205 = scmp.eq.s32.totalorder %s32, 0
      %p206 = por %p204, %p205
      %s208 = sadd.s32 %s207, 1
      %p211 = scmp.eq.s32.totalorder %s26, 1
      %p212 = scmp.ne.s32.totalorder %s207, %s209
      %p213 = scmp.eq.s32.totalorder %s26, 0
      %p214 = por %p212, %p213
      %p215 = scmp.ne.s32.totalorder %s207, %s209
      %p216 = scmp.eq.s32.totalorder %s31, 1
      %p217 = por %p215, %p216
      %p218 = scmp.ne.s32.totalorder %s209, %s210
      %p219 = scmp.eq.s32.totalorder %s31, 0
      %p220 = por %p218, %p219
      %p221 = scmp.ne.s32.totalorder %s209, %s210
      %p222 = scmp.eq.s32.totalorder %s32, 1
      %p223 = por %p221, %p222
      %p225 = scmp.ne.s32.totalorder %s210, %s224
      %p226 = scmp.eq.s32.totalorder %s32, 0
      %p227 = por %p225, %p226
      %s229 = sadd.s32 %s228, 1
      %p232 = scmp.eq.s32.totalorder %s26, 1
      %p233 = scmp.ne.s32.totalorder %s228, %s230
      %p234 = scmp.eq.s32.totalorder %s26, 0
      %p235 = por %p233, %p234
      %p236 = scmp.ne.s32.totalorder %s228, %s230
      %p237 = scmp.eq.s32.totalorder %s31, 1
      %p238 = por %p236, %p237
      %p239 = scmp.ne.s32.totalorder %s230, %s231
      %p240 = scmp.eq.s32.totalorder %s31, 0
      %p241 = por %p239, %p240
      %p242 = scmp.ne.s32.totalorder %s230, %s231
      %p243 = scmp.eq.s32.totalorder %s32, 1
      %p244 = por %p242, %p243
      %p246 = scmp.ne.s32.totalorder %s231, %s245
      %p247 = scmp.eq.s32.totalorder %s32, 0
      %p248 = por %p246, %p247
      %s250 = sadd.s32 %s249, 1
      %p253 = scmp.eq.s32.totalorder %s26, 1
      %p254 = scmp.ne.s32.totalorder %s249, %s251
      %p255 = scmp.eq.s32.totalorder %s26, 0
      %p256 = por %p254, %p255
      %p257 = scmp.ne.s32.totalorder %s249, %s251
      %p258 = scmp.eq.s32.totalorder %s31, 1
      %p259 = por %p257, %p258
      %p260 = scmp.ne.s32.totalorder %s251, %s252
      %p261 = scmp.eq.s32.totalorder %s31, 0
      %p262 = por %p260, %p261
      %p263 = scmp.ne.s32.totalorder %s251, %s252
      %p264 = scmp.eq.s32.totalorder %s32, 1
      %p265 = por %p263, %p264
      %p267 = scmp.ne.s32.totalorder %s252, %s266
      %p268 = scmp.eq.s32.totalorder %s32, 0
      %p269 = por %p267, %p268
      %s271 = sadd.s32 %s270, 1
      %p274 = scmp.eq.s32.totalorder %s26, 1
      %p275 = scmp.ne.s32.totalorder %s270, %s272
      %p276 = scmp.eq.s32.totalorder %s26, 0
      %p277 = por %p275, %p276
      %p278 = scmp.ne.s32.totalorder %s270, %s272
      %p279 = scmp.eq.s32.totalorder %s31, 1
      %p280 = por %p278, %p279
      %p281 = scmp.ne.s32.totalorder %s272, %s273
      %p282 = scmp.eq.s32.totalorder %s31, 0
      %p283 = por %p281, %p282
      %p284 = scmp.ne.s32.totalorder %s272, %s273
      %p285 = scmp.eq.s32.totalorder %s32, 1
      %p286 = por %p284, %p285
      %p288 = scmp.ne.s32.totalorder %s273, %s287
      %p289 = scmp.eq.s32.totalorder %s32, 0
      %p290 = por %p288, %p289
      %s292 = sadd.s32 %s291, 1
      %p295 = scmp.eq.s32.totalorder %s26, 1
      %p296 = scmp.ne.s32.totalorder %s291, %s293
      %p297 = scmp.eq.s32.totalorder %s26, 0
      %p298 = por %p296, %p297
      %p299 = scmp.ne.s32.totalorder %s291, %s293
      %p300 = scmp.eq.s32.totalorder %s31, 1
      %p301 = por %p299, %p300
      %p302 = scmp.ne.s32.totalorder %s293, %s294
      %p303 = scmp.eq.s32.totalorder %s31, 0
      %p304 = por %p302, %p303
      %p305 = scmp.ne.s32.totalorder %s293, %s294
      %p306 = scmp.eq.s32.totalorder %s32, 1
      %p307 = por %p305, %p306
      %p309 = scmp.ne.s32.totalorder %s294, %s308
      %p310 = scmp.eq.s32.totalorder %s32, 0
      %p311 = por %p309, %p310
      %s313 = sadd.s32 %s312, 1
      %p316 = scmp.eq.s32.totalorder %s26, 1
      %p317 = scmp.ne.s32.totalorder %s312, %s314
      %p318 = scmp.eq.s32.totalorder %s26, 0
      %p319 = por %p317, %p318
      %p320 = scmp.ne.s32.totalorder %s312, %s314
      %p321 = scmp.eq.s32.totalorder %s31, 1
      %p322 = por %p320, %p321
      %p323 = scmp.ne.s32.totalorder %s314, %s315
      %p324 = scmp.eq.s32.totalorder %s31, 0
      %p325 = por %p323, %p324
      %p326 = scmp.ne.s32.totalorder %s314, %s315
      %p327 = scmp.eq.s32.totalorder %s32, 1
      %p328 = por %p326, %p327
      %p330 = scmp.ne.s32.totalorder %s315, %s329
      %p331 = scmp.eq.s32.totalorder %s32, 0
      %p332 = por %p330, %p331
      %s334 = sadd.s32 %s333, 1
      %p337 = scmp.eq.s32.totalorder %s26, 1
      %p338 = scmp.ne.s32.totalorder %s333, %s335
      %p339 = scmp.eq.s32.totalorder %s26, 0
      %p340 = por %p338, %p339
      %p341 = scmp.ne.s32.totalorder %s333, %s335
      %p342 = scmp.eq.s32.totalorder %s31, 1
      %p343 = por %p341, %p342
      %p344 = scmp.ne.s32.totalorder %s335, %s336
      %p345 = scmp.eq.s32.totalorder %s31, 0
      %p346 = por %p344, %p345
      %p347 = scmp.ne.s32.totalorder %s335, %s336
      %p348 = scmp.eq.s32.totalorder %s32, 1
      %p349 = por %p347, %p348
      %p351 = scmp.ne.s32.totalorder %s336, %s350
      %p352 = scmp.eq.s32.totalorder %s32, 0
      %p353 = por %p351, %p352
      %s354 = ssub.s32 %s26, %s33
      %p355 = scmp.eq.s32.totalorder %s354, 0
      %s357 = sadd.s32 %s356, 1
      %s358 = scalar_select %p355, %s356, %s357
      %p361 = pneg %p355
      %p362 = scmp.eq.s32.totalorder %s26, 1
      %p363 = por %p361, %p362
      %p364 = scmp.ne.s32.totalorder %s356, %s359
      %p365 = scmp.eq.s32.totalorder %s26, 0
      %p366 = por %p364, %p365
      %p367 = scmp.ne.s32.totalorder %s356, %s359
      %p368 = scmp.eq.s32.totalorder %s31, 1
      %p369 = por %p367, %p368
      %p370 = scmp.ne.s32.totalorder %s359, %s360
      %p371 = scmp.eq.s32.totalorder %s31, 0
      %p372 = por %p370, %p371
      %p373 = scmp.ne.s32.totalorder %s359, %s360
      %p374 = scmp.eq.s32.totalorder %s32, 1
      %p375 = por %p373, %p374
      %p377 = scmp.ne.s32.totalorder %s360, %s376
      %p378 = scmp.eq.s32.totalorder %s32, 0
      %p379 = por %p377, %p378
      %p380 = scmp.le.s32.totalorder 1, %s26
      %p381 = scmp.lt.s32.totalorder %s26, 3
      %p382 = pnand %p380, %p381
      %p383 = pneg %p382
      // Predicated region
      $region9: #{tpu_custom_call.1} parent=5 // pred_check
        _
      $region10: #{tpu_custom_call.1} parent=5 // pred_check_branch
        %385 = sbr.rel (%p382) target = $region12
      $region11: #{tpu_custom_call.1} parent=5 // pred_region
        %s386 = ssub.s32 %s26, 1
        // Predicated region
        $region13: #{tpu_custom_call.1} parent=11 // pred_check
          %p387 = pneg %p73
        $region14: #{tpu_custom_call.1} parent=11 // pred_check_branch
          %389 = sbr.rel (%p387) target = $region16
        $region15: #{tpu_custom_call.1} parent=11 // pred_region
          _
        $region16: #{tpu_custom_call.1} parent=11 // pred_fallthru
          _
        // Predicated region
        $region17: #{tpu_custom_call.1} parent=11 // pred_check
          %p390 = pneg %p94
        $region18: #{tpu_custom_call.1} parent=11 // pred_check_branch
          %392 = sbr.rel (%p390) target = $region20
        $region19: #{tpu_custom_call.1} parent=11 // pred_region
          _
        $region20: #{tpu_custom_call.1} parent=11 // pred_fallthru
          _
        // Predicated region
        $region21: #{tpu_custom_call.1} parent=11 // pred_check
          %p393 = pneg %p115
        $region22: #{tpu_custom_call.1} parent=11 // pred_check_branch
          %395 = sbr.rel (%p393) target = $region24
        $region23: #{tpu_custom_call.1} parent=11 // pred_region
          _
        $region24: #{tpu_custom_call.1} parent=11 // pred_fallthru
          _
        // Predicated region
        $region25: #{tpu_custom_call.1} parent=11 // pred_check
          %p396 = pneg %p136
        $region26: #{tpu_custom_call.1} parent=11 // pred_check_branch
          %398 = sbr.rel (%p396) target = $region28
        $region27: #{tpu_custom_call.1} parent=11 // pred_region
          _
        $region28: #{tpu_custom_call.1} parent=11 // pred_fallthru
          _
        // Predicated region
        $region29: #{tpu_custom_call.1} parent=11 // pred_check
          %p399 = pneg %p157
        $region30: #{tpu_custom_call.1} parent=11 // pred_check_branch
          %401 = sbr.rel (%p399) target = $region32
        $region31: #{tpu_custom_call.1} parent=11 // pred_region
          %s403 = ssub.s32 256, 256
          %404 = vsyncadd [#allocation4], %s403
          %s405 = sshll.u32 [#allocation3], 4
          %s406 = int_to_ptr.vmem [resolvable:$true] %s405
          %411 = dma.hbm_to_vmem [thread:$0]  %s5, 256, %s406, [#allocation4], 64, 64, 4
        $region32: #{tpu_custom_call.1} parent=11 // pred_fallthru
          _
        // Predicated region
        $region33: #{tpu_custom_call.1} parent=11 // pred_check
          %p412 = pneg %p178
        $region34: #{tpu_custom_call.1} parent=11 // pred_check_branch
          %414 = sbr.rel (%p412) target = $region36
        $region35: #{tpu_custom_call.1} parent=11 // pred_region
          _
        $region36: #{tpu_custom_call.1} parent=11 // pred_fallthru
          _
        // Predicated region
        $region37: #{tpu_custom_call.1} parent=11 // pred_check
          %p415 = pneg %p199
        $region38: #{tpu_custom_call.1} parent=11 // pred_check_branch
          %417 = sbr.rel (%p415) target = $region40
        $region39: #{tpu_custom_call.1} parent=11 // pred_region
          %s419 = ssub.s32 256, 256
          %420 = vsyncadd [#allocation7], %s419
          %s421 = sshll.u32 [#allocation6], 4
          %s422 = int_to_ptr.vmem [resolvable:$true] %s421
          %427 = dma.hbm_to_vmem [thread:$0]  %s7, 256, %s422, [#allocation7], 64, 64, 4
        $region40: #{tpu_custom_call.1} parent=11 // pred_fallthru
          _
        // Predicated region
        $region41: #{tpu_custom_call.1} parent=11 // pred_check
          %p428 = pneg %p220
        $region42: #{tpu_custom_call.1} parent=11 // pred_check_branch
          %430 = sbr.rel (%p428) target = $region44
        $region43: #{tpu_custom_call.1} parent=11 // pred_region
          _
        $region44: #{tpu_custom_call.1} parent=11 // pred_fallthru
          _
        // Predicated region
        $region45: #{tpu_custom_call.1} parent=11 // pred_check
          %p431 = pneg %p241
        $region46: #{tpu_custom_call.1} parent=11 // pred_check_branch
          %433 = sbr.rel (%p431) target = $region48
        $region47: #{tpu_custom_call.1} parent=11 // pred_region
          _
        $region48: #{tpu_custom_call.1} parent=11 // pred_fallthru
          _
        // Predicated region
        $region49: #{tpu_custom_call.1} parent=11 // pred_check
          %p434 = pneg %p262
        $region50: #{tpu_custom_call.1} parent=11 // pred_check_branch
          %436 = sbr.rel (%p434) target = $region52
        $region51: #{tpu_custom_call.1} parent=11 // pred_region
          _
        $region52: #{tpu_custom_call.1} parent=11 // pred_fallthru
          _
        // Predicated region
        $region53: #{tpu_custom_call.1} parent=11 // pred_check
          %p437 = pneg %p283
        $region54: #{tpu_custom_call.1} parent=11 // pred_check_branch
          %439 = sbr.rel (%p437) target = $region56
        $region55: #{tpu_custom_call.1} parent=11 // pred_region
          _
        $region56: #{tpu_custom_call.1} parent=11 // pred_fallthru
          _
        // Predicated region
        $region57: #{tpu_custom_call.1} parent=11 // pred_check
          %p440 = pneg %p304
        $region58: #{tpu_custom_call.1} parent=11 // pred_check_branch
          %442 = sbr.rel (%p440) target = $region60
        $region59: #{tpu_custom_call.1} parent=11 // pred_region
          _
        $region60: #{tpu_custom_call.1} parent=11 // pred_fallthru
          _
        // Predicated region
        $region61: #{tpu_custom_call.1} parent=11 // pred_check
          %p443 = pneg %p325
        $region62: #{tpu_custom_call.1} parent=11 // pred_check_branch
          %445 = sbr.rel (%p443) target = $region64
        $region63: #{tpu_custom_call.1} parent=11 // pred_region
          _
        $region64: #{tpu_custom_call.1} parent=11 // pred_fallthru
          _
        // Predicated region
        $region65: #{tpu_custom_call.1} parent=11 // pred_check
          %p446 = pneg %p346
        $region66: #{tpu_custom_call.1} parent=11 // pred_check_branch
          %448 = sbr.rel (%p446) target = $region68
        $region67: #{tpu_custom_call.1} parent=11 // pred_region
          _
        $region68: #{tpu_custom_call.1} parent=11 // pred_fallthru
          _
      $region12: #{tpu_custom_call.1} parent=5 // pred_fallthru
        _
      %p449 = scmp.lt.s32.totalorder %s26, 2
      // Predicated region
      $region69: #{tpu_custom_call.1} parent=5 // pred_check
        %p450 = pneg %p449
      $region70: #{tpu_custom_call.1} parent=5 // pred_check_branch
        %452 = sbr.rel (%p450) target = $region72
      $region71: #{tpu_custom_call.1} parent=5 // pred_region
        // Predicated region
        $region73: #{tpu_custom_call.1} parent=71 // pred_check
          %p453 = pneg %p46
        $region74: #{tpu_custom_call.1} parent=71 // pred_check_branch
          %455 = sbr.rel (%p453) target = $region76
        $region75: #{tpu_custom_call.1} parent=71 // pred_region
          %p456 = scmp.lt.s32.totalorder %s26, 1
          %s457 = scalar_select %p456, %s26, 1
          %s458 = smul.addr %s457, 8
          %s459 = scalar_lea.vmem %s0, %s458
        $region76: #{tpu_custom_call.1} parent=71 // pred_fallthru
          _
      $region72: #{tpu_custom_call.1} parent=5 // pred_fallthru
        _
      %p460 = scmp.le.s32.totalorder 1, %s26
      %p461 = scmp.lt.s32.totalorder %s26, 3
      %p462 = pnand %p460, %p461
      %p463 = pneg %p462
      // Predicated region
      $region77: #{tpu_custom_call.1} parent=5 // pred_check
        _
      $region78: #{tpu_custom_call.1} parent=5 // pred_check_branch
        %465 = sbr.rel (%p462) target = $region80
      $region79: #{tpu_custom_call.1} parent=5 // pred_region
        %s466 = ssub.s32 %s26, 1
        // Predicated region
        $region81: #{tpu_custom_call.1} parent=79 // pred_check
          %p467 = pneg %p157
        $region82: #{tpu_custom_call.1} parent=79 // pred_check_branch
          %469 = sbr.rel (%p467) target = $region84
        $region83: #{tpu_custom_call.1} parent=79 // pred_region
          %470 = dma.done [#allocation4], 256
        $region84: #{tpu_custom_call.1} parent=79 // pred_fallthru
          _
        // Predicated region
        $region85: #{tpu_custom_call.1} parent=79 // pred_check
          %p471 = pneg %p199
        $region86: #{tpu_custom_call.1} parent=79 // pred_check_branch
          %473 = sbr.rel (%p471) target = $region88
        $region87: #{tpu_custom_call.1} parent=79 // pred_region
          %474 = dma.done [#allocation7], 256
        $region88: #{tpu_custom_call.1} parent=79 // pred_fallthru
          _
        %p475 = scmp.lt.s32.totalorder %s31, 1
        %s476 = scalar_select %p475, %s31, 1
        %s477 = smul.addr %s476, 8
        %s478 = scalar_lea.vmem %s0, %s477
        %p479 = pneg %p52
        %p480 = pneg %p49
        %p481 = pneg %p73
        %p482 = pneg %p70
        %p483 = pneg %p94
        %p484 = pneg %p91
        %p485 = pneg %p115
        %p486 = pneg %p112
        %p487 = pneg %p136
        %p488 = pneg %p133
        %p489 = pneg %p157
        %p490 = pneg %p154
        %p491 = pneg %p178
        %p492 = pneg %p175
        %p493 = pneg %p199
        %p494 = pneg %p196
        %p495 = pneg %p220
        %p496 = pneg %p217
        %p497 = pneg %p241
        %p498 = pneg %p238
        %p499 = pneg %p262
        %p500 = pneg %p259
        %p501 = pneg %p283
        %p502 = pneg %p280
        %p503 = pneg %p304
        %p504 = pneg %p301
        %p505 = pneg %p325
        %p506 = pneg %p322
        %p507 = pneg %p346
        %p508 = pneg %p343
        %p509 = pneg %p372
        %p510 = pneg %p369
        %s511 = sand.u32 %s359, 1
        %s512 = scalar_lea.sflag [#allocation5], %s511
        %s513 = sand.u32 %s359, 1
        %s514 = smul.addr %s513, 8
        %s515 = scalar_lea.vmem [#allocation8], %s514
        %p516 = scmp.lt.s32.totalorder %s31, 1
        %s517 = scalar_select %p516, %s31, 1
        %s518 = smul.addr %s517, 8
        %s519 = scalar_lea.vmem %s0, %s518
        %v521 = vld [vmem:[%s519] sm:$0xff]
        %vm522 = vcmask 261120
        %v523 = vsel %vm522, %v521, 0.0
        %524 = vadd.xlane.f32.xlu0 %v523
        %v525 = vpop.xlane.xlu0 %524
        %v526 = vrcp.pop 32.0
        %v527 = vmul.f32 %v525, %v526
        %v528 = vsub.f32 %v521, %v527
        %v529 = vmul.f32 %v528, %v528
        %v530 = vsel %vm522, %v529, 0.0
        %531 = vadd.xlane.f32.xlu0 %v530
        %v532 = vpop.xlane.xlu0 %531
        %v533 = vmul.f32 %v532, 0.032258064
        %v534 = vrsqrt.pop %v533
        %v535 = vmul.f32 %v533, %v534
        %vm536 = vcmp.eq.f32.partialorder %v533, inf
        %v537 = vsel %vm536, %v533, %v535
        %vm538 = vcmp.eq.f32.partialorder %v533, 0.0
        %v539 = vand.u32 %v533, 2147483648
        %v540 = vsel %vm538, %v539, %v537
        %v541 = vadd.f32 %v540, 1e-06
        %v542 = vrcp.pop %v541
        %v543 = vmul.f32 1.0, %v542
        %v544 = vld [vmem:[%s11] sm:$0x1]
        %v545 = vmul.f32 %v528, %v543
        %v547 = vlaneseq
        %v548 = vshrl.u32 %v547, 7
        %v549 = vsub.s32 0, %v548
        %v550 = vrot.slane %v544, %v549
        %v552 = vmul.f32 %v550, %v545
        %v553 = vld [vmem:[%s12] sm:$0x1]
        %v555 = vlaneseq
        %v556 = vshrl.u32 %v555, 7
        %v557 = vsub.s32 0, %v556
        %v558 = vrot.slane %v553, %v557
        %v560 = vadd.f32 %v552, %v558
        %v561 = vld [vmem:[%s3] sm:$0xf]
        %v562 = vld [vmem:[%s3 + $0x4] sm:$0xf]
        %v563 = vld [vmem:[%s3 + $0x8] sm:$0xf]
        %v564 = vld [vmem:[%s3 + $0xc] sm:$0xf]
        %v565 = vpack.c.bf16 %v560, %v560
        %v566 = vld [vmem:[%s4] sm:$0x1]
        %v568 = vlaneseq
        %v569 = vshrl.u32 %v568, 7
        %v570 = vsub.s32 0, %v569
        %v571 = vrot.slane %v566, %v570
        %v577 = vunpack.c.l.b16 %v561
        %v578 = vunpack.c.l.b16 %v562
        %v579 = vunpack.c.l.b16 %v563
        %v580 = vunpack.c.l.b16 %v564
        %v581 = vpack.c.b16 %v578, %v577
        %v582 = vpack.c.b16 %v580, %v579
        %v586 = vsel %vm522, %v565, 0
        %588 = vmatprep.subr.bf16.mxu0 0
        %589 = vmatpush1.bf16.msra.mxu0 %v581
        %590 = vmatprep.subr.bf16.mxu0 0
        %591 = vmatpush1.bf16.msra.mxu0 %v582
        %592 = vmatprep.subr.bf16.mxu0 0
        %593 = vmatpush1.bf16.msra.mxu0 0
        %594 = vmatprep.subr.bf16.mxu0 0
        %595 = vmatpush1.bf16.msra.mxu0 0
        %596 = vmatprep.subr.bf16.mxu0 0
        %597 = vmatpush1.bf16.msra.mxu0 0
        %598 = vmatprep.subr.bf16.mxu0 0
        %599 = vmatpush1.bf16.msra.mxu0 0
        %600 = vmatprep.subr.bf16.mxu0 0
        %601 = vmatpush1.bf16.msra.mxu0 0
        %602 = vmatprep.subr.bf16.mxu0 0
        %603 = vmatpush1.bf16.msra.mxu0 0
        %604 = vmatprep.subr.bf16.mxu0 0
        %605 = vmatpush1.bf16.msra.mxu0 0
        %606 = vmatprep.subr.bf16.mxu0 0
        %607 = vmatpush1.bf16.msra.mxu0 0
        %608 = vmatprep.subr.bf16.mxu0 0
        %609 = vmatpush1.bf16.msra.mxu0 0
        %610 = vmatprep.subr.bf16.mxu0 0
        %611 = vmatpush1.bf16.msra.mxu0 0
        %612 = vmatprep.subr.bf16.mxu0 0
        %613 = vmatpush1.bf16.msra.mxu0 0
        %614 = vmatprep.subr.bf16.mxu0 0
        %615 = vmatpush1.bf16.msra.mxu0 0
        %616 = vmatprep.subr.bf16.mxu0 0
        %617 = vmatpush1.bf16.msra.mxu0 0
        %618 = vmatprep.subr.bf16.mxu0 0
        %619 = vmatpush1.bf16.msra.mxu0 0
        %620 = vmatprep.mubr.bf16.mxu0 0
        %621 = vmatmul.mubr.bf16.gmra.mrb[0].mxu0 %v586
        %v622 = vpop.f32.mrb[0].mxu0
        %v623 = vadd.f32 %v571, %v622
        %v624 = vpop.f32.mrb[0].mxu0
        %v625 = vpop.f32.mrb[0].mxu0
        %v626 = vpop.f32.mrb[0].mxu0
        %627 = vdwg.mxu0
        %v628 = vld [vmem:[%s1] sm:$0xf]
        %v629 = vld [vmem:[%s1 + $0x4] sm:$0xf]
        %v630 = vld [vmem:[%s1 + $0x8] sm:$0xf]
        %v631 = vld [vmem:[%s1 + $0xc] sm:$0xf]
        %v632 = vld [vmem:[%s2] sm:$0x1]
        %v637 = vunpack.c.l.b16 %v628
        %v638 = vunpack.c.l.b16 %v629
        %v639 = vunpack.c.l.b16 %v630
        %v640 = vunpack.c.l.b16 %v631
        %v641 = vpack.c.b16 %v638, %v637
        %v642 = vpack.c.b16 %v640, %v639
        %645 = vmatprep.subr.bf16.mxu0 0
        %646 = vmatpush1.bf16.msra.mxu0 %v641
        %647 = vmatprep.subr.bf16.mxu0 0
        %648 = vmatpush1.bf16.msra.mxu0 %v642
        %649 = vmatprep.subr.bf16.mxu0 0
        %650 = vmatpush1.bf16.msra.mxu0 0
        %651 = vmatprep.subr.bf16.mxu0 0
        %652 = vmatpush1.bf16.msra.mxu0 0
        %653 = vmatprep.subr.bf16.mxu0 0
        %654 = vmatpush1.bf16.msra.mxu0 0
        %655 = vmatprep.subr.bf16.mxu0 0
        %656 = vmatpush1.bf16.msra.mxu0 0
        %657 = vmatprep.subr.bf16.mxu0 0
        %658 = vmatpush1.bf16.msra.mxu0 0
        %659 = vmatprep.subr.bf16.mxu0 0
        %660 = vmatpush1.bf16.msra.mxu0 0
        %661 = vmatprep.subr.bf16.mxu0 0
        %662 = vmatpush1.bf16.msra.mxu0 0
        %663 = vmatprep.subr.bf16.mxu0 0
        %664 = vmatpush1.bf16.msra.mxu0 0
        %665 = vmatprep.subr.bf16.mxu0 0
        %666 = vmatpush1.bf16.msra.mxu0 0
        %667 = vmatprep.subr.bf16.mxu0 0
        %668 = vmatpush1.bf16.msra.mxu0 0
        %669 = vmatprep.subr.bf16.mxu0 0
        %670 = vmatpush1.bf16.msra.mxu0 0
        %671 = vmatprep.subr.bf16.mxu0 0
        %672 = vmatpush1.bf16.msra.mxu0 0
        %673 = vmatprep.subr.bf16.mxu0 0
        %674 = vmatpush1.bf16.msra.mxu0 0
        %675 = vmatprep.subr.bf16.mxu0 0
        %676 = vmatpush1.bf16.msra.mxu0 0
        %677 = vmatprep.mubr.bf16.mxu0 0
        %678 = vmatmul.mubr.bf16.gmra.mrb[0].mxu0 %v586
        %v679 = vpop.f32.mrb[0].mxu0
        %v680 = vadd.f32 %v632, %v679
        %v681 = vpop.f32.mrb[0].mxu0
        %v682 = vpop.f32.mrb[0].mxu0
        %v683 = vpop.f32.mrb[0].mxu0
        %684 = vdwg.mxu0
        %v685 = vlaneseq
        %v686 = vshrl.u32 %v685, 7
        %vm687 = vcmp.eq.s32.totalorder %v686, 0
        %v688 = vsel %vm687, 1, 0
        %vm689 = vcmp.eq.s32.totalorder %v688, 1
        %v690 = vlaneseq
        %v691 = vshrl.u32 %v690, 7
        %v692 = vsub.s32 0, %v691
        %v693 = vrot.slane %v680, %v692
        %v694 = vsel %vm689, %v693, %v623
        %v695 = vmul.f32 %v694, 0.35355338
        %v696 = vpack.c.bf16 %v695, %v695
        %v697 = vpack.c.bf16 %v694, %v694
        %699 = vrot.lane.b32.xlu0 %v697, 96
        %v700 = vpop.permute.xlu0 %699
        %vm701 = vcmask 64512
        %v703 = vsel %vm701, %v696, 0
        %v706 = vsel %vm701, %v700, 0
        %708 = vmatprep.subr.bf16.mxu0 0
        %709 = vmatpush1.bf16.xpose.msra.mxu0 %v706
        %710 = vmatprep.subr.bf16.mxu0 0
        %711 = vmatpush1.bf16.xpose.msra.mxu0 0
        %712 = vmatprep.subr.bf16.mxu0 0
        %713 = vmatpush1.bf16.xpose.msra.mxu0 0
        %714 = vmatprep.subr.bf16.mxu0 0
        %715 = vmatpush1.bf16.xpose.msra.mxu0 0
        %716 = vmatprep.subr.bf16.mxu0 0
        %717 = vmatpush1.bf16.xpose.msra.mxu0 0
        %718 = vmatprep.subr.bf16.mxu0 0
        %719 = vmatpush1.bf16.xpose.msra.mxu0 0
        %720 = vmatprep.subr.bf16.mxu0 0
        %721 = vmatpush1.bf16.xpose.msra.mxu0 0
        %722 = vmatprep.subr.bf16.mxu0 0
        %723 = vmatpush1.bf16.xpose.msra.mxu0 0
        %724 = vmatprep.subr.bf16.mxu0 0
        %725 = vmatpush1.bf16.xpose.msra.mxu0 0
        %726 = vmatprep.subr.bf16.mxu0 0
        %727 = vmatpush1.bf16.xpose.msra.mxu0 0
        %728 = vmatprep.subr.bf16.mxu0 0
        %729 = vmatpush1.bf16.xpose.msra.mxu0 0
        %730 = vmatprep.subr.bf16.mxu0 0
        %731 = vmatpush1.bf16.xpose.msra.mxu0 0
        %732 = vmatprep.subr.bf16.mxu0 0
        %733 = vmatpush1.bf16.xpose.msra.mxu0 0
        %734 = vmatprep.subr.bf16.mxu0 0
        %735 = vmatpush1.bf16.xpose.msra.mxu0 0
        %736 = vmatprep.subr.bf16.mxu0 0
        %737 = vmatpush1.bf16.xpose.msra.mxu0 0
        %738 = vmatprep.subr.bf16.mxu0 0
        %739 = vmatpush1.bf16.xpose.msra.mxu0 0
        %740 = vmatprep.mubr.bf16.mxu0 0
        %741 = vmatmul.mubr.bf16.gmra.mrb[0].mxu0 %v703
        %v742 = vpop.f32.mrb[0].mxu0
        %v743 = vadd.f32 0.0, %v742
        %v744 = vpop.f32.mrb[0].mxu0
        %v745 = vpop.f32.mrb[0].mxu0
        %v746 = vpop.f32.mrb[0].mxu0
        %747 = vdwg.mxu0
        %v748 = vsel %vm701, %v743, -inf
        %749 = vmax.xlane.f32.xlu0 %v748
        %v750 = vpop.xlane.xlu0 %749
        %v751 = vsub.f32 %v743, %v750
        %v752 = vmul.f32 %v751, 1.442695
        %v753 = vpow.pop %v752
        %v754 = vsel %vm701, %v753, 0.0
        %755 = vadd.xlane.f32.xlu0 %v754
        %v756 = vpop.xlane.xlu0 %755
        %v757 = vrcp.pop %v756
        %v758 = vmul.f32 %v753, %v757
        %v759 = vpack.c.bf16 %v758, %v758
        %760 = vrot.lane.b32.xlu0 %v697, 64
        %v761 = vpop.permute.xlu0 %760
        %v763 = vsel %vm701, %v759, 0
        %vm765 = vcmask 1043456
        %v767 = vsel %vm765, %v761, 0
        %769 = vmatprep.subr.bf16.mxu0 0
        %770 = vmatpush1.bf16.msra.mxu0 %v767
        %771 = vmatprep.subr.bf16.mxu0 0
        %772 = vmatpush1.bf16.msra.mxu0 0
        %773 = vmatprep.subr.bf16.mxu0 0
        %774 = vmatpush1.bf16.msra.mxu0 0
        %775 = vmatprep.subr.bf16.mxu0 0
        %776 = vmatpush1.bf16.msra.mxu0 0
        %777 = vmatprep.subr.bf16.mxu0 0
        %778 = vmatpush1.bf16.msra.mxu0 0
        %779 = vmatprep.subr.bf16.mxu0 0
        %780 = vmatpush1.bf16.msra.mxu0 0
        %781 = vmatprep.subr.bf16.mxu0 0
        %782 = vmatpush1.bf16.msra.mxu0 0
        %783 = vmatprep.subr.bf16.mxu0 0
        %784 = vmatpush1.bf16.msra.mxu0 0
        %785 = vmatprep.subr.bf16.mxu0 0
        %786 = vmatpush1.bf16.msra.mxu0 0
        %787 = vmatprep.subr.bf16.mxu0 0
        %788 = vmatpush1.bf16.msra.mxu0 0
        %789 = vmatprep.subr.bf16.mxu0 0
        %790 = vmatpush1.bf16.msra.mxu0 0
        %791 = vmatprep.subr.bf16.mxu0 0
        %792 = vmatpush1.bf16.msra.mxu0 0
        %793 = vmatprep.subr.bf16.mxu0 0
        %794 = vmatpush1.bf16.msra.mxu0 0
        %795 = vmatprep.subr.bf16.mxu0 0
        %796 = vmatpush1.bf16.msra.mxu0 0
        %797 = vmatprep.subr.bf16.mxu0 0
        %798 = vmatpush1.bf16.msra.mxu0 0
        %799 = vmatprep.subr.bf16.mxu0 0
        %800 = vmatpush1.bf16.msra.mxu0 0
        %801 = vmatprep.mubr.bf16.mxu0 0
        %802 = vmatmul.mubr.bf16.gmra.mrb[0].mxu0 %v763
        %v803 = vpop.f32.mrb[0].mxu0
        %v804 = vadd.f32 0.0, %v803
        %v805 = vpop.f32.mrb[0].mxu0
        %v806 = vpop.f32.mrb[0].mxu0
        %v807 = vpop.f32.mrb[0].mxu0
        %808 = vdwg.mxu0
        %809 = vst.msk [vmem:[#allocation2] sm:$0xff] %vm701, %v804
        %811 = vrot.lane.b32.xlu0 %v696, 120
        %v812 = vpop.permute.xlu0 %811
        %813 = vrot.lane.b32.xlu0 %v697, 88
        %v814 = vpop.permute.xlu0 %813
        %v816 = vsel %vm701, %v812, 0
        %v819 = vsel %vm701, %v814, 0
        %821 = vmatprep.subr.bf16.mxu0 0
        %822 = vmatpush1.bf16.xpose.msra.mxu0 %v819
        %823 = vmatprep.subr.bf16.mxu0 0
        %824 = vmatpush1.bf16.xpose.msra.mxu0 0
        %825 = vmatprep.subr.bf16.mxu0 0
        %826 = vmatpush1.bf16.xpose.msra.mxu0 0
        %827 = vmatprep.subr.bf16.mxu0 0
        %828 = vmatpush1.bf16.xpose.msra.mxu0 0
        %829 = vmatprep.subr.bf16.mxu0 0
        %830 = vmatpush1.bf16.xpose.msra.mxu0 0
        %831 = vmatprep.subr.bf16.mxu0 0
        %832 = vmatpush1.bf16.xpose.msra.mxu0 0
        %833 = vmatprep.subr.bf16.mxu0 0
        %834 = vmatpush1.bf16.xpose.msra.mxu0 0
        %835 = vmatprep.subr.bf16.mxu0 0
        %836 = vmatpush1.bf16.xpose.msra.mxu0 0
        %837 = vmatprep.subr.bf16.mxu0 0
        %838 = vmatpush1.bf16.xpose.msra.mxu0 0
        %839 = vmatprep.subr.bf16.mxu0 0
        %840 = vmatpush1.bf16.xpose.msra.mxu0 0
        %841 = vmatprep.subr.bf16.mxu0 0
        %842 = vmatpush1.bf16.xpose.msra.mxu0 0
        %843 = vmatprep.subr.bf16.mxu0 0
        %844 = vmatpush1.bf16.xpose.msra.mxu0 0
        %845 = vmatprep.subr.bf16.mxu0 0
        %846 = vmatpush1.bf16.xpose.msra.mxu0 0
        %847 = vmatprep.subr.bf16.mxu0 0
        %848 = vmatpush1.bf16.xpose.msra.mxu0 0
        %849 = vmatprep.subr.bf16.mxu0 0
        %850 = vmatpush1.bf16.xpose.msra.mxu0 0
        %851 = vmatprep.subr.bf16.mxu0 0
        %852 = vmatpush1.bf16.xpose.msra.mxu0 0
        %853 = vmatprep.mubr.bf16.mxu0 0
        %854 = vmatmul.mubr.bf16.gmra.mrb[0].mxu0 %v816
        %v855 = vpop.f32.mrb[0].mxu0
        %v856 = vadd.f32 0.0, %v855
        %v857 = vpop.f32.mrb[0].mxu0
        %v858 = vpop.f32.mrb[0].mxu0
        %v859 = vpop.f32.mrb[0].mxu0
        %860 = vdwg.mxu0
        %v861 = vsel %vm701, %v856, -inf
        %862 = vmax.xlane.f32.xlu0 %v861
        %v863 = vpop.xlane.xlu0 %862
        %v864 = vsub.f32 %v856, %v863
        %v865 = vmul.f32 %v864, 1.442695
        %v866 = vpow.pop %v865
        %v867 = vsel %vm701, %v866, 0.0
        %868 = vadd.xlane.f32.xlu0 %v867
        %v869 = vpop.xlane.xlu0 %868
        %v870 = vrcp.pop %v869
        %v871 = vmul.f32 %v866, %v870
        %v872 = vpack.c.bf16 %v871, %v871
        %873 = vrot.lane.b32.xlu0 %v697, 56
        %v874 = vpop.permute.xlu0 %873
        %v876 = vsel %vm701, %v872, 0
        %v879 = vsel %vm765, %v874, 0
        %881 = vmatprep.subr.bf16.mxu0 0
        %882 = vmatpush1.bf16.msra.mxu0 %v879
        %883 = vmatprep.subr.bf16.mxu0 0
        %884 = vmatpush1.bf16.msra.mxu0 0
        %885 = vmatprep.subr.bf16.mxu0 0
        %886 = vmatpush1.bf16.msra.mxu0 0
        %887 = vmatprep.subr.bf16.mxu0 0
        %888 = vmatpush1.bf16.msra.mxu0 0
        %889 = vmatprep.subr.bf16.mxu0 0
        %890 = vmatpush1.bf16.msra.mxu0 0
        %891 = vmatprep.subr.bf16.mxu0 0
        %892 = vmatpush1.bf16.msra.mxu0 0
        %893 = vmatprep.subr.bf16.mxu0 0
        %894 = vmatpush1.bf16.msra.mxu0 0
        %895 = vmatprep.subr.bf16.mxu0 0
        %896 = vmatpush1.bf16.msra.mxu0 0
        %897 = vmatprep.subr.bf16.mxu0 0
        %898 = vmatpush1.bf16.msra.mxu0 0
        %899 = vmatprep.subr.bf16.mxu0 0
        %900 = vmatpush1.bf16.msra.mxu0 0
        %901 = vmatprep.subr.bf16.mxu0 0
        %902 = vmatpush1.bf16.msra.mxu0 0
        %903 = vmatprep.subr.bf16.mxu0 0
        %904 = vmatpush1.bf16.msra.mxu0 0
        %905 = vmatprep.subr.bf16.mxu0 0
        %906 = vmatpush1.bf16.msra.mxu0 0
        %907 = vmatprep.subr.bf16.mxu0 0
        %908 = vmatpush1.bf16.msra.mxu0 0
        %909 = vmatprep.subr.bf16.mxu0 0
        %910 = vmatpush1.bf16.msra.mxu0 0
        %911 = vmatprep.subr.bf16.mxu0 0
        %912 = vmatpush1.bf16.msra.mxu0 0
        %913 = vmatprep.mubr.bf16.mxu0 0
        %914 = vmatmul.mubr.bf16.gmra.mrb[0].mxu0 %v876
        %v915 = vpop.f32.mrb[0].mxu0
        %v916 = vadd.f32 0.0, %v915
        %v917 = vpop.f32.mrb[0].mxu0
        %v918 = vpop.f32.mrb[0].mxu0
        %v919 = vpop.f32.mrb[0].mxu0
        %920 = vdwg.mxu0
        %922 = vrot.lane.b32.xlu0 %v916, 8
        %v923 = vpop.permute.xlu0 %922
        %vm925 = vcmask 130112
        %926 = vst.msk [vmem:[#allocation2] sm:$0xff] %vm925, %v923
        %927 = vrot.lane.b32.xlu0 %v696, 112
        %v928 = vpop.permute.xlu0 %927
        %929 = vrot.lane.b32.xlu0 %v697, 80
        %v930 = vpop.permute.xlu0 %929
        %v932 = vsel %vm701, %v928, 0
        %v935 = vsel %vm701, %v930, 0
        %937 = vmatprep.subr.bf16.mxu0 0
        %938 = vmatpush1.bf16.xpose.msra.mxu0 %v935
        %939 = vmatprep.subr.bf16.mxu0 0
        %940 = vmatpush1.bf16.xpose.msra.mxu0 0
        %941 = vmatprep.subr.bf16.mxu0 0
        %942 = vmatpush1.bf16.xpose.msra.mxu0 0
        %943 = vmatprep.subr.bf16.mxu0 0
        %944 = vmatpush1.bf16.xpose.msra.mxu0 0
        %945 = vmatprep.subr.bf16.mxu0 0
        %946 = vmatpush1.bf16.xpose.msra.mxu0 0
        %947 = vmatprep.subr.bf16.mxu0 0
        %948 = vmatpush1.bf16.xpose.msra.mxu0 0
        %949 = vmatprep.subr.bf16.mxu0 0
        %950 = vmatpush1.bf16.xpose.msra.mxu0 0
        %951 = vmatprep.subr.bf16.mxu0 0
        %952 = vmatpush1.bf16.xpose.msra.mxu0 0
        %953 = vmatprep.subr.bf16.mxu0 0
        %954 = vmatpush1.bf16.xpose.msra.mxu0 0
        %955 = vmatprep.subr.bf16.mxu0 0
        %956 = vmatpush1.bf16.xpose.msra.mxu0 0
        %957 = vmatprep.subr.bf16.mxu0 0
        %958 = vmatpush1.bf16.xpose.msra.mxu0 0
        %959 = vmatprep.subr.bf16.mxu0 0
        %960 = vmatpush1.bf16.xpose.msra.mxu0 0
        %961 = vmatprep.subr.bf16.mxu0 0
        %962 = vmatpush1.bf16.xpose.msra.mxu0 0
        %963 = vmatprep.subr.bf16.mxu0 0
        %964 = vmatpush1.bf16.xpose.msra.mxu0 0
        %965 = vmatprep.subr.bf16.mxu0 0
        %966 = vmatpush1.bf16.xpose.msra.mxu0 0
        %967 = vmatprep.subr.bf16.mxu0 0
        %968 = vmatpush1.bf16.xpose.msra.mxu0 0
        %969 = vmatprep.mubr.bf16.mxu0 0
        %970 = vmatmul.mubr.bf16.gmra.mrb[0].mxu0 %v932
        %v971 = vpop.f32.mrb[0].mxu0
        %v972 = vadd.f32 0.0, %v971
        %v973 = vpop.f32.mrb[0].mxu0
        %v974 = vpop.f32.mrb[0].mxu0
        %v975 = vpop.f32.mrb[0].mxu0
        %976 = vdwg.mxu0
        %v977 = vsel %vm701, %v972, -inf
        %978 = vmax.xlane.f32.xlu0 %v977
        %v979 = vpop.xlane.xlu0 %978
        %v980 = vsub.f32 %v972, %v979
        %v981 = vmul.f32 %v980, 1.442695
        %v982 = vpow.pop %v981
        %v983 = vsel %vm701, %v982, 0.0
        %984 = vadd.xlane.f32.xlu0 %v983
        %v985 = vpop.xlane.xlu0 %984
        %v986 = vrcp.pop %v985
        %v987 = vmul.f32 %v982, %v986
        %v988 = vpack.c.bf16 %v987, %v987
        %989 = vrot.lane.b32.xlu0 %v697, 48
        %v990 = vpop.permute.xlu0 %989
        %v992 = vsel %vm701, %v988, 0
        %v995 = vsel %vm765, %v990, 0
        %997 = vmatprep.subr.bf16.mxu0 0
        %998 = vmatpush1.bf16.msra.mxu0 %v995
        %999 = vmatprep.subr.bf16.mxu0 0
        %1000 = vmatpush1.bf16.msra.mxu0 0
        %1001 = vmatprep.subr.bf16.mxu0 0
        %1002 = vmatpush1.bf16.msra.mxu0 0
        %1003 = vmatprep.subr.bf16.mxu0 0
        %1004 = vmatpush1.bf16.msra.mxu0 0
        %1005 = vmatprep.subr.bf16.mxu0 0
        %1006 = vmatpush1.bf16.msra.mxu0 0
        %1007 = vmatprep.subr.bf16.mxu0 0
        %1008 = vmatpush1.bf16.msra.mxu0 0
        %1009 = vmatprep.subr.bf16.mxu0 0
        %1010 = vmatpush1.bf16.msra.mxu0 0
        %1011 = vmatprep.subr.bf16.mxu0 0
        %1012 = vmatpush1.bf16.msra.mxu0 0
        %1013 = vmatprep.subr.bf16.mxu0 0
        %1014 = vmatpush1.bf16.msra.mxu0 0
        %1015 = vmatprep.subr.bf16.mxu0 0
        %1016 = vmatpush1.bf16.msra.mxu0 0
        %1017 = vmatprep.subr.bf16.mxu0 0
        %1018 = vmatpush1.bf16.msra.mxu0 0
        %1019 = vmatprep.subr.bf16.mxu0 0
        %1020 = vmatpush1.bf16.msra.mxu0 0
        %1021 = vmatprep.subr.bf16.mxu0 0
        %1022 = vmatpush1.bf16.msra.mxu0 0
        %1023 = vmatprep.subr.bf16.mxu0 0
        %1024 = vmatpush1.bf16.msra.mxu0 0
        %1025 = vmatprep.subr.bf16.mxu0 0
        %1026 = vmatpush1.bf16.msra.mxu0 0
        %1027 = vmatprep.subr.bf16.mxu0 0
        %1028 = vmatpush1.bf16.msra.mxu0 0
        %1029 = vmatprep.mubr.bf16.mxu0 0
        %1030 = vmatmul.mubr.bf16.gmra.mrb[0].mxu0 %v992
        %v1031 = vpop.f32.mrb[0].mxu0
        %v1032 = vadd.f32 0.0, %v1031
        %v1033 = vpop.f32.mrb[0].mxu0
        %v1034 = vpop.f32.mrb[0].mxu0
        %v1035 = vpop.f32.mrb[0].mxu0
        %1036 = vdwg.mxu0
        %1038 = vrot.lane.b32.xlu0 %v1032, 16
        %v1039 = vpop.permute.xlu0 %1038
        %vm1041 = vcmask 195712
        %1042 = vst.msk [vmem:[#allocation2] sm:$0xff] %vm1041, %v1039
        %1043 = vrot.lane.b32.xlu0 %v696, 104
        %v1044 = vpop.permute.xlu0 %1043
        %1045 = vrot.lane.b32.xlu0 %v697, 72
        %v1046 = vpop.permute.xlu0 %1045
        %v1048 = vsel %vm701, %v1044, 0
        %v1051 = vsel %vm701, %v1046, 0
        %1053 = vmatprep.subr.bf16.mxu0 0
        %1054 = vmatpush1.bf16.xpose.msra.mxu0 %v1051
        %1055 = vmatprep.subr.bf16.mxu0 0
        %1056 = vmatpush1.bf16.xpose.msra.mxu0 0
        %1057 = vmatprep.subr.bf16.mxu0 0
        %1058 = vmatpush1.bf16.xpose.msra.mxu0 0
        %1059 = vmatprep.subr.bf16.mxu0 0
        %1060 = vmatpush1.bf16.xpose.msra.mxu0 0
        %1061 = vmatprep.subr.bf16.mxu0 0
        %1062 = vmatpush1.bf16.xpose.msra.mxu0 0
        %1063 = vmatprep.subr.bf16.mxu0 0
        %1064 = vmatpush1.bf16.xpose.msra.mxu0 0
        %1065 = vmatprep.subr.bf16.mxu0 0
        %1066 = vmatpush1.bf16.xpose.msra.mxu0 0
        %1067 = vmatprep.subr.bf16.mxu0 0
        %1068 = vmatpush1.bf16.xpose.msra.mxu0 0
        %1069 = vmatprep.subr.bf16.mxu0 0
        %1070 = vmatpush1.bf16.xpose.msra.mxu0 0
        %1071 = vmatprep.subr.bf16.mxu0 0
        %1072 = vmatpush1.bf16.xpose.msra.mxu0 0
        %1073 = vmatprep.subr.bf16.mxu0 0
        %1074 = vmatpush1.bf16.xpose.msra.mxu0 0
        %1075 = vmatprep.subr.bf16.mxu0 0
        %1076 = vmatpush1.bf16.xpose.msra.mxu0 0
        %1077 = vmatprep.subr.bf16.mxu0 0
        %1078 = vmatpush1.bf16.xpose.msra.mxu0 0
        %1079 = vmatprep.subr.bf16.mxu0 0
        %1080 = vmatpush1.bf16.xpose.msra.mxu0 0
        %1081 = vmatprep.subr.bf16.mxu0 0
        %1082 = vmatpush1.bf16.xpose.msra.mxu0 0
        %1083 = vmatprep.subr.bf16.mxu0 0
        %1084 = vmatpush1.bf16.xpose.msra.mxu0 0
        %1085 = vmatprep.mubr.bf16.mxu0 0
        %1086 = vmatmul.mubr.bf16.gmra.mrb[0].mxu0 %v1048
        %v1087 = vpop.f32.mrb[0].mxu0
        %v1088 = vadd.f32 0.0, %v1087
        %v1089 = vpop.f32.mrb[0].mxu0
        %v1090 = vpop.f32.mrb[0].mxu0
        %v1091 = vpop.f32.mrb[0].mxu0
        %1092 = vdwg.mxu0
        %v1093 = vsel %vm701, %v1088, -inf
        %1094 = vmax.xlane.f32.xlu0 %v1093
        %v1095 = vpop.xlane.xlu0 %1094
        %v1096 = vsub.f32 %v1088, %v1095
        %v1097 = vmul.f32 %v1096, 1.442695
        %v1098 = vpow.pop %v1097
        %v1099 = vsel %vm701, %v1098, 0.0
        %1100 = vadd.xlane.f32.xlu0 %v1099
        %v1101 = vpop.xlane.xlu0 %1100
        %v1102 = vrcp.pop %v1101
        %v1103 = vmul.f32 %v1098, %v1102
        %v1104 = vpack.c.bf16 %v1103, %v1103
        %1105 = vrot.lane.b32.xlu0 %v697, 40
        %v1106 = vpop.permute.xlu0 %1105
        %v1108 = vsel %vm701, %v1104, 0
        %v1111 = vsel %vm765, %v1106, 0
        %1113 = vmatprep.subr.bf16.mxu0 0
        %1114 = vmatpush1.bf16.msra.mxu0 %v1111
        %1115 = vmatprep.subr.bf16.mxu0 0
        %1116 = vmatpush1.bf16.msra.mxu0 0
        %1117 = vmatprep.subr.bf16.mxu0 0
        %1118 = vmatpush1.bf16.msra.mxu0 0
        %1119 = vmatprep.subr.bf16.mxu0 0
        %1120 = vmatpush1.bf16.msra.mxu0 0
        %1121 = vmatprep.subr.bf16.mxu0 0
        %1122 = vmatpush1.bf16.msra.mxu0 0
        %1123 = vmatprep.subr.bf16.mxu0 0
        %1124 = vmatpush1.bf16.msra.mxu0 0
        %1125 = vmatprep.subr.bf16.mxu0 0
        %1126 = vmatpush1.bf16.msra.mxu0 0
        %1127 = vmatprep.subr.bf16.mxu0 0
        %1128 = vmatpush1.bf16.msra.mxu0 0
        %1129 = vmatprep.subr.bf16.mxu0 0
        %1130 = vmatpush1.bf16.msra.mxu0 0
        %1131 = vmatprep.subr.bf16.mxu0 0
        %1132 = vmatpush1.bf16.msra.mxu0 0
        %1133 = vmatprep.subr.bf16.mxu0 0
        %1134 = vmatpush1.bf16.msra.mxu0 0
        %1135 = vmatprep.subr.bf16.mxu0 0
        %1136 = vmatpush1.bf16.msra.mxu0 0
        %1137 = vmatprep.subr.bf16.mxu0 0
        %1138 = vmatpush1.bf16.msra.mxu0 0
        %1139 = vmatprep.subr.bf16.mxu0 0
        %1140 = vmatpush1.bf16.msra.mxu0 0
        %1141 = vmatprep.subr.bf16.mxu0 0
        %1142 = vmatpush1.bf16.msra.mxu0 0
        %1143 = vmatprep.subr.bf16.mxu0 0
        %1144 = vmatpush1.bf16.msra.mxu0 0
        %1145 = vmatprep.mubr.bf16.mxu0 0
        %1146 = vmatmul.mubr.bf16.gmra.mrb[0].mxu0 %v1108
        %v1147 = vpop.f32.mrb[0].mxu0
        %v1148 = vadd.f32 0.0, %v1147
        %v1149 = vpop.f32.mrb[0].mxu0
        %v1150 = vpop.f32.mrb[0].mxu0
        %v1151 = vpop.f32.mrb[0].mxu0
        %1152 = vdwg.mxu0
        %1154 = vrot.lane.b32.xlu0 %v1148, 24
        %v1155 = vpop.permute.xlu0 %1154
        %vm1157 = vcmask 261312
        %1158 = vst.msk [vmem:[#allocation2] sm:$0xff] %vm1157, %v1155
        %v1159 = vld [vmem:[#allocation2] sm:$0xff]
        %v1160 = vld [vmem:[#allocation3] sm:$0xf]
        %v1161 = vld [vmem:[#allocation3 + $0x4] sm:$0xf]
        %v1162 = vld [vmem:[#allocation3 + $0x8] sm:$0xf]
        %v1163 = vld [vmem:[#allocation3 + $0xc] sm:$0xf]
        %v1164 = vpack.c.bf16 %v1159, %v1159
        %v1169 = vunpack.c.l.b16 %v1160
        %v1170 = vunpack.c.l.b16 %v1161
        %v1171 = vunpack.c.l.b16 %v1162
        %v1172 = vunpack.c.l.b16 %v1163
        %v1173 = vpack.c.b16 %v1170, %v1169
        %v1174 = vpack.c.b16 %v1172, %v1171
        %v1178 = vsel %vm522, %v1164, 0
        %1180 = vmatprep.subr.bf16.mxu0 0
        %1181 = vmatpush1.bf16.msra.mxu0 %v1173
        %1182 = vmatprep.subr.bf16.mxu0 0
        %1183 = vmatpush1.bf16.msra.mxu0 %v1174
        %1184 = vmatprep.subr.bf16.mxu0 0
        %1185 = vmatpush1.bf16.msra.mxu0 0
        %1186 = vmatprep.subr.bf16.mxu0 0
        %1187 = vmatpush1.bf16.msra.mxu0 0
        %1188 = vmatprep.subr.bf16.mxu0 0
        %1189 = vmatpush1.bf16.msra.mxu0 0
        %1190 = vmatprep.subr.bf16.mxu0 0
        %1191 = vmatpush1.bf16.msra.mxu0 0
        %1192 = vmatprep.subr.bf16.mxu0 0
        %1193 = vmatpush1.bf16.msra.mxu0 0
        %1194 = vmatprep.subr.bf16.mxu0 0
        %1195 = vmatpush1.bf16.msra.mxu0 0
        %1196 = vmatprep.subr.bf16.mxu0 0
        %1197 = vmatpush1.bf16.msra.mxu0 0
        %1198 = vmatprep.subr.bf16.mxu0 0
        %1199 = vmatpush1.bf16.msra.mxu0 0
        %1200 = vmatprep.subr.bf16.mxu0 0
        %1201 = vmatpush1.bf16.msra.mxu0 0
        %1202 = vmatprep.subr.bf16.mxu0 0
        %1203 = vmatpush1.bf16.msra.mxu0 0
        %1204 = vmatprep.subr.bf16.mxu0 0
        %1205 = vmatpush1.bf16.msra.mxu0 0
        %1206 = vmatprep.subr.bf16.mxu0 0
        %1207 = vmatpush1.bf16.msra.mxu0 0
        %1208 = vmatprep.subr.bf16.mxu0 0
        %1209 = vmatpush1.bf16.msra.mxu0 0
        %1210 = vmatprep.subr.bf16.mxu0 0
        %1211 = vmatpush1.bf16.msra.mxu0 0
        %1212 = vmatprep.mubr.bf16.mxu0 0
        %1213 = vmatmul.mubr.bf16.gmra.mrb[0].mxu0 %v1178
        %v1214 = vpop.f32.mrb[0].mxu0
        %v1215 = vadd.f32 0.0, %v1214
        %v1216 = vpop.f32.mrb[0].mxu0
        %v1217 = vpop.f32.mrb[0].mxu0
        %v1218 = vpop.f32.mrb[0].mxu0
        %1219 = vdwg.mxu0
        %v1220 = vadd.f32 %v521, %v1215
        %v1221 = vld [vmem:[%s6] sm:$0x1]
        %v1223 = vlaneseq
        %v1224 = vshrl.u32 %v1223, 7
        %v1225 = vsub.s32 0, %v1224
        %v1226 = vrot.slane %v1221, %v1225
        %v1228 = vadd.f32 %v1220, %v1226
        %v1229 = vsel %vm522, %v1228, 0.0
        %1230 = vadd.xlane.f32.xlu0 %v1229
        %v1231 = vpop.xlane.xlu0 %1230
        %v1232 = vmul.f32 %v1231, %v526
        %v1233 = vsub.f32 %v1228, %v1232
        %v1234 = vmul.f32 %v1233, %v1233
        %v1235 = vsel %vm522, %v1234, 0.0
        %1236 = vadd.xlane.f32.xlu0 %v1235
        %v1237 = vpop.xlane.xlu0 %1236
        %v1238 = vmul.f32 %v1237, 0.032258064
        %v1239 = vrsqrt.pop %v1238
        %v1240 = vmul.f32 %v1238, %v1239
        %vm1241 = vcmp.eq.f32.partialorder %v1238, inf
        %v1242 = vsel %vm1241, %v1238, %v1240
        %vm1243 = vcmp.eq.f32.partialorder %v1238, 0.0
        %v1244 = vand.u32 %v1238, 2147483648
        %v1245 = vsel %vm1243, %v1244, %v1242
        %v1246 = vadd.f32 %v1245, 1e-06
        %v1247 = vrcp.pop %v1246
        %v1248 = vmul.f32 1.0, %v1247
        %v1249 = vld [vmem:[%s13] sm:$0x1]
        %v1250 = vmul.f32 %v1233, %v1248
        %v1252 = vlaneseq
        %v1253 = vshrl.u32 %v1252, 7
        %v1254 = vsub.s32 0, %v1253
        %v1255 = vrot.slane %v1249, %v1254
        %v1257 = vmul.f32 %v1255, %v1250
        %v1258 = vld [vmem:[%s14] sm:$0x1]
        %v1260 = vlaneseq
        %v1261 = vshrl.u32 %v1260, 7
        %v1262 = vsub.s32 0, %v1261
        %v1263 = vrot.slane %v1258, %v1262
        %v1265 = vadd.f32 %v1257, %v1263
        %v1266 = vld [vmem:[#allocation6] sm:$0xf]
        %v1267 = vld [vmem:[#allocation6 + $0x4] sm:$0xf]
        %v1268 = vld [vmem:[#allocation6 + $0x8] sm:$0xf]
        %v1269 = vld [vmem:[#allocation6 + $0xc] sm:$0xf]
        %v1270 = vpack.c.bf16 %v1265, %v1265
        %v1271 = vld [vmem:[%s8] sm:$0x1]
        %v1273 = vlaneseq
        %v1274 = vshrl.u32 %v1273, 7
        %v1275 = vsub.s32 0, %v1274
        %v1276 = vrot.slane %v1271, %v1275
        %v1282 = vunpack.c.l.b16 %v1266
        %v1283 = vunpack.c.l.b16 %v1267
        %v1284 = vunpack.c.l.b16 %v1268
        %v1285 = vunpack.c.l.b16 %v1269
        %v1286 = vpack.c.b16 %v1283, %v1282
        %v1287 = vpack.c.b16 %v1285, %v1284
        %v1291 = vsel %vm522, %v1270, 0
        %1293 = vmatprep.subr.bf16.mxu0 0
        %1294 = vmatpush1.bf16.msra.mxu0 %v1286
        %1295 = vmatprep.subr.bf16.mxu0 0
        %1296 = vmatpush1.bf16.msra.mxu0 %v1287
        %1297 = vmatprep.subr.bf16.mxu0 0
        %1298 = vmatpush1.bf16.msra.mxu0 0
        %1299 = vmatprep.subr.bf16.mxu0 0
        %1300 = vmatpush1.bf16.msra.mxu0 0
        %1301 = vmatprep.subr.bf16.mxu0 0
        %1302 = vmatpush1.bf16.msra.mxu0 0
        %1303 = vmatprep.subr.bf16.mxu0 0
        %1304 = vmatpush1.bf16.msra.mxu0 0
        %1305 = vmatprep.subr.bf16.mxu0 0
        %1306 = vmatpush1.bf16.msra.mxu0 0
        %1307 = vmatprep.subr.bf16.mxu0 0
        %1308 = vmatpush1.bf16.msra.mxu0 0
        %1309 = vmatprep.subr.bf16.mxu0 0
        %1310 = vmatpush1.bf16.msra.mxu0 0
        %1311 = vmatprep.subr.bf16.mxu0 0
        %1312 = vmatpush1.bf16.msra.mxu0 0
        %1313 = vmatprep.subr.bf16.mxu0 0
        %1314 = vmatpush1.bf16.msra.mxu0 0
        %1315 = vmatprep.subr.bf16.mxu0 0
        %1316 = vmatpush1.bf16.msra.mxu0 0
        %1317 = vmatprep.subr.bf16.mxu0 0
        %1318 = vmatpush1.bf16.msra.mxu0 0
        %1319 = vmatprep.subr.bf16.mxu0 0
        %1320 = vmatpush1.bf16.msra.mxu0 0
        %1321 = vmatprep.subr.bf16.mxu0 0
        %1322 = vmatpush1.bf16.msra.mxu0 0
        %1323 = vmatprep.subr.bf16.mxu0 0
        %1324 = vmatpush1.bf16.msra.mxu0 0
        %1325 = vmatprep.mubr.bf16.mxu0 0
        %1326 = vmatmul.mubr.bf16.gmra.mrb[0].mxu0 %v1291
        %v1327 = vpop.f32.mrb[0].mxu0
        %v1328 = vadd.f32 %v1276, %v1327
        %v1329 = vpop.f32.mrb[0].mxu0
        %v1330 = vpop.f32.mrb[0].mxu0
        %v1331 = vpop.f32.mrb[0].mxu0
        %1332 = vdwg.mxu0
        %v1333 = vmax.f32 %v1328, 0.0
        %v1334 = vld [vmem:[%s9] sm:$0xf]
        %v1335 = vld [vmem:[%s9 + $0x4] sm:$0xf]
        %v1336 = vld [vmem:[%s9 + $0x8] sm:$0xf]
        %v1337 = vld [vmem:[%s9 + $0xc] sm:$0xf]
        %v1338 = vld [vmem:[%s9 + $0x10] sm:$0xf]
        %v1339 = vld [vmem:[%s9 + $0x14] sm:$0xf]
        %v1340 = vld [vmem:[%s9 + $0x18] sm:$0xf]
        %v1341 = vld [vmem:[%s9 + $0x1c] sm:$0xf]
        %v1342 = vpack.c.bf16 %v1333, %v1333
        %v1351 = vunpack.c.l.b16 %v1334
        %v1352 = vunpack.c.l.b16 %v1335
        %v1353 = vunpack.c.l.b16 %v1336
        %v1354 = vunpack.c.l.b16 %v1337
        %v1355 = vunpack.c.l.b16 %v1338
        %v1356 = vunpack.c.l.b16 %v1339
        %v1357 = vunpack.c.l.b16 %v1340
        %v1358 = vunpack.c.l.b16 %v1341
        %v1359 = vpack.c.b16 %v1352, %v1351
        %v1360 = vpack.c.b16 %v1354, %v1353
        %v1361 = vpack.c.b16 %v1356, %v1355
        %v1362 = vpack.c.b16 %v1358, %v1357
        %vm1367 = vcmask 523264
        %v1369 = vsel %vm1367, %v1342, 0
        %1371 = vmatprep.subr.bf16.mxu0 0
        %1372 = vmatpush1.bf16.msra.mxu0 %v1359
        %1373 = vmatprep.subr.bf16.mxu0 0
        %1374 = vmatpush1.bf16.msra.mxu0 %v1360
        %1375 = vmatprep.subr.bf16.mxu0 0
        %1376 = vmatpush1.bf16.msra.mxu0 %v1361
        %1377 = vmatprep.subr.bf16.mxu0 0
        %1378 = vmatpush1.bf16.msra.mxu0 %v1362
        %1379 = vmatprep.subr.bf16.mxu0 0
        %1380 = vmatpush1.bf16.msra.mxu0 0
        %1381 = vmatprep.subr.bf16.mxu0 0
        %1382 = vmatpush1.bf16.msra.mxu0 0
        %1383 = vmatprep.subr.bf16.mxu0 0
        %1384 = vmatpush1.bf16.msra.mxu0 0
        %1385 = vmatprep.subr.bf16.mxu0 0
        %1386 = vmatpush1.bf16.msra.mxu0 0
        %1387 = vmatprep.subr.bf16.mxu0 0
        %1388 = vmatpush1.bf16.msra.mxu0 0
        %1389 = vmatprep.subr.bf16.mxu0 0
        %1390 = vmatpush1.bf16.msra.mxu0 0
        %1391 = vmatprep.subr.bf16.mxu0 0
        %1392 = vmatpush1.bf16.msra.mxu0 0
        %1393 = vmatprep.subr.bf16.mxu0 0
        %1394 = vmatpush1.bf16.msra.mxu0 0
        %1395 = vmatprep.subr.bf16.mxu0 0
        %1396 = vmatpush1.bf16.msra.mxu0 0
        %1397 = vmatprep.subr.bf16.mxu0 0
        %1398 = vmatpush1.bf16.msra.mxu0 0
        %1399 = vmatprep.subr.bf16.mxu0 0
        %1400 = vmatpush1.bf16.msra.mxu0 0
        %1401 = vmatprep.subr.bf16.mxu0 0
        %1402 = vmatpush1.bf16.msra.mxu0 0
        %1403 = vmatprep.mubr.bf16.mxu0 0
        %1404 = vmatmul.mubr.bf16.gmra.mrb[0].mxu0 %v1369
        %v1405 = vpop.f32.mrb[0].mxu0
        %v1406 = vadd.f32 0.0, %v1405
        %v1407 = vpop.f32.mrb[0].mxu0
        %v1408 = vpop.f32.mrb[0].mxu0
        %v1409 = vpop.f32.mrb[0].mxu0
        %1410 = vdwg.mxu0
        %v1411 = vadd.f32 %v1228, %v1406
        %v1412 = vld [vmem:[%s10] sm:$0x1]
        %v1414 = vlaneseq
        %v1415 = vshrl.u32 %v1414, 7
        %v1416 = vsub.s32 0, %v1415
        %v1417 = vrot.slane %v1412, %v1416
        %v1419 = vadd.f32 %v1411, %v1417
        %1420 = vst.msk [vmem:[%s515] sm:$0xff] %vm522, %v1419
        %s1421 = sand.u32 %s359, 1
        %s1422 = scalar_lea.sflag [#allocation5], %s1421
        %s1423 = sand.u32 %s359, 1
        %s1424 = smul.addr %s1423, 8
        %s1425 = scalar_lea.vmem [#allocation8], %s1424
        // Predicated region
        $region89: #{tpu_custom_call.1} parent=79 // pred_check
          %p1426 = pneg %p369
        $region90: #{tpu_custom_call.1} parent=79 // pred_check_branch
          %1428 = sbr.rel (%p1426) target = $region92
        $region91: #{tpu_custom_call.1} parent=79 // pred_region
          %s1430 = ssub.s32 128, 128
          %1431 = vsyncadd %s1422, %s1430
          %s1432 = smul.addr %s31, 128
          %s1433 = scalar_lea.hbm %s15, %s1432
          %s1435 = sshll.u32 %s1425, 4
          %s1436 = int_to_ptr.vmem [resolvable:$true] %s1435
          %1438 = dma.vmem_to_hbm [thread:$0]  %s1436, 128, %s1433, %s1422
        $region92: #{tpu_custom_call.1} parent=79 // pred_fallthru
          _
      $region80: #{tpu_custom_call.1} parent=5 // pred_fallthru
        _
      %p1439 = scmp.le.s32.totalorder 2, %s26
      // Predicated region
      $region93: #{tpu_custom_call.1} parent=5 // pred_check
        %p1440 = pneg %p1439
      $region94: #{tpu_custom_call.1} parent=5 // pred_check_branch
        %1442 = sbr.rel (%p1440) target = $region96
      $region95: #{tpu_custom_call.1} parent=5 // pred_region
        %s1443 = ssub.s32 %s26, 2
        // Predicated region
        $region97: #{tpu_custom_call.1} parent=95 // pred_check
          %p1444 = pneg %p375
        $region98: #{tpu_custom_call.1} parent=95 // pred_check_branch
          %1446 = sbr.rel (%p1444) target = $region100
        $region99: #{tpu_custom_call.1} parent=95 // pred_region
          %s1447 = sand.u32 %s360, 1
          %s1448 = scalar_lea.sflag [#allocation5], %s1447
          %s1449 = sand.u32 %s360, 1
          %s1450 = smul.addr %s1449, 8
          %s1451 = scalar_lea.vmem [#allocation8], %s1450
          %1452 = dma.done %s1448, 128
        $region100: #{tpu_custom_call.1} parent=95 // pred_fallthru
          _
      $region96: #{tpu_custom_call.1} parent=5 // pred_fallthru
        _
    $region6: #{tpu_custom_call.1} parent=1 // loop_footer
      %s30 = sadd.s32 1, %s26
    $region7: #{tpu_custom_call.1} parent=1 // loop_footer_branch
      %25 = sbr.rel target = $region3
    $region8: #{tpu_custom_call.1} parent=1 // loop_exit
      _
    %1453 = vsyncpa [#allocation4], 1
    %s1454 = scalar_lea.sflag [#allocation4], 1
    %1455 = vsyncpa %s1454, 1
    %1456 = vsyncpa [#allocation7], 1
    %1457 = vsyncpa [#allocation5], 1
    %s1458 = scalar_lea.sflag [#allocation5], 1
    %1459 = vsyncpa %s1458, 1

</llo_original>
